<compile_context>
chip_gen: v7x
topology: tpu7x:2x2x1
jax: 0.10.0
libtpu: 0.0.40
codegen_flags: <defaults>
</compile_context>

<pallas_src>
import functools
import math

import jax
import jax.numpy as jnp
from jax import lax
from jax.experimental import pallas as pl
from jax.experimental.pallas import tpu as pltpu


# ----------------------------------------------------------------------------
# Kernel: one grid point = (batch block b, decode step t)
# ----------------------------------------------------------------------------
def ende_arnet_kernel(enc_x_ref, dec_x_ref, wcoef_ref,
                      e_wi_ref, e_wh_ref, e_bias_ref,
                      d_wi_ref, d_wh_ref, d_bias_ref,
                      dfused_w_ref, dfused_b_ref,
                      r_wh_ref, p_w_ref, p_b_ref,
                      logits_ref, loss_ref,
                      h_d, c_d, h_r, c_r, loss_acc,
                      *, bf16_exp):
    t = pl.program_id(1)
    T_enc = enc_x_ref.shape[0]
    TB = dec_x_ref.shape[1]
    H = h_d.shape[-1]
    Wp = logits_ref.shape[-1]
    f32 = jnp.float32
    bf16 = jnp.bfloat16

    def lstm_tail(pre, h, c, wh):
        # `pre` already holds i2h(x) + (b_i2h + b_h2h); only the recurrent matmul here.
        sums = pre + jnp.dot(h.astype(bf16), wh, preferred_element_type=f32)
        in_gate = jax.nn.sigmoid(sums[:, 0:H])
        forget_gate = jax.nn.sigmoid(sums[:, H:2 * H])
        out_gate = jax.nn.sigmoid(sums[:, 2 * H:3 * H])
        in_transform = jnp.tanh(sums[:, 3 * H:4 * H])
        c_new = forget_gate * c + in_gate * in_transform
        h_new = out_gate * jnp.tanh(c_new)
        return h_new, c_new

    # ---- t == 0: run the whole encoder for this batch block, init decode/rcst state ----
    @pl.when(t == 0)
    def _():
        e_wi = e_wi_ref[...]
        e_wh = e_wh_ref[...]
        e_bias = e_bias_ref[...]

        def enc_step(s, carry):
            h, c = carry
            pre = jnp.dot(enc_x_ref[s], e_wi, preferred_element_type=f32) + e_bias
            return lstm_tail(pre, h, c, e_wh)

        zeros = jnp.zeros((TB, H), f32)
        h_enc, c_enc = lax.fori_loop(0, T_enc, enc_step, (zeros, zeros),
                                     unroll=(T_enc <= 8))
        h_d[...] = h_enc
        c_d[...] = c_enc
        h_r[...] = h_enc
        c_r[...] = c_enc
        loss_acc[...] = jnp.zeros_like(loss_acc)

    # ---- one decode + reconstruction step (weights are VMEM-resident across steps) ----
    d_wi = d_wi_ref[...]
    d_wh = d_wh_ref[...]
    d_bias = d_bias_ref[...]
    dfused_w = dfused_w_ref[...]
    dfused_b = dfused_b_ref[...]
    r_wh = r_wh_ref[...]
    p_w = p_w_ref[...]
    p_b = p_b_ref[...]

    pre_h = h_d[...]                       # decode_state[0] before this step
    c_prev = c_d[...]

    dec_pre = jnp.dot(dec_x_ref[0], d_wi, preferred_element_type=f32) + d_bias
    h_new, c_new = lstm_tail(dec_pre, pre_h, c_prev, d_wh)
    h_d[...] = h_new
    c_d[...] = c_new

    # fused shared-LHS matmul: [ logit | rcst i2h ] in a single MXU push
    fused = jnp.dot(h_new.astype(bf16), dfused_w,
                    preferred_element_type=f32) + dfused_b

    # log_softmax over the (padded) vocab; padded columns have bias -1e9 -> exp == 0
    logits = fused[:, :Wp]
    mx = jnp.max(logits, axis=-1, keepdims=True)
    shifted = logits - mx
    if bf16_exp:                           # bf16 EUP exp (enable on v6e/v7x only)
        ex = jnp.exp(shifted.astype(bf16)).astype(f32)
    else:
        ex = jnp.exp(shifted)
    lse = mx + jnp.log(jnp.sum(ex, axis=-1, keepdims=True))
    logits_ref[0] = (logits - lse).astype(logits_ref.dtype)

    # reconstruction LSTM fed with the decoder output (== h_new, dropout = identity)
    hr_new, cr_new = lstm_tail(fused[:, Wp:], h_r[...], c_r[...], r_wh)
    h_r[...] = hr_new
    c_r[...] = cr_new
    rcst_h = jnp.dot(hr_new.astype(bf16), p_w, preferred_element_type=f32) + p_b

    diff = rcst_h - pre_h                  # (TB, H)
    # wcoef[t] = mask[:,t] * rcst_weight / sum_b(mask[:,t])  (precomputed, 0-safe)
    loss_acc[...] = loss_acc[...] + diff * diff * wcoef_ref[0]

    # ---- last step: emit the per-batch-block partial loss (reduced in the wrapper) ----
    @pl.when(t == pl.num_programs(1) - 1)
    def _():
        loss_ref[0] = jnp.sum(loss_acc[...], axis=0, keepdims=True)


# ----------------------------------------------------------------------------
# Wrapper (glue: embedding gather, layout / padding, bias folding, pallas_call)
# ----------------------------------------------------------------------------
def encode_decode_arnet_forward(params, code_matrix, comment_matrix, comment_mask,
                                rcst_weight, *, logits_dtype=jnp.float32,
                                bf16_exp=False, max_batch_block=64):
    embed = params["embed"]                            # (token_cnt+1, E)
    B, T_enc = code_matrix.shape
    _, T_dec = comment_matrix.shape
    E = embed.shape[1]
    H = params["enc_wh"].shape[0]
    W = params["logit_w"].shape[1]

    # batch block: multiple of 16 (bf16 sublane packing); vocab: lane-dense multiple of 128
    TB = min(max_batch_block, ((B + 15) // 16) * 16)
    TB = max(16, (TB // 16) * 16)
    B_blocks = -(-B // TB)
    B_pad = B_blocks * TB
    pad_b = B_pad - B
    Wp = ((W + 127) // 128) * 128
    bf16 = jnp.bfloat16

    # embedding lookups (glue), time-major layout, batch padding, bf16 MXU operands
    enc_x = jnp.transpose(embed[code_matrix], (1, 0, 2))                 # (T_enc, B, E)
    dec_x = jnp.transpose(embed[comment_matrix], (1, 0, 2))              # (T_dec, B, E)
    enc_x = jnp.pad(enc_x, ((0, 0), (0, pad_b), (0, 0))).astype(bf16)
    dec_x = jnp.pad(dec_x, ((0, 0), (0, pad_b), (0, 0))).astype(bf16)

    # per-(t, b) reconstruction-loss coefficient:
    #   mask[b,t] * rcst_weight / sum_b(mask[b,t]),  0 when the whole column is empty
    # TODO(synk): PyTorch would break out of the decode loop at an all-zero column; here
    # those steps still run (their logits differ from the truncated reference) but they
    # contribute 0 to the loss.
    mask_t = jnp.transpose(comment_mask, (1, 0)).astype(jnp.float32)     # (T_dec, B)
    col_sum = jnp.sum(mask_t, axis=1, keepdims=True)
    coef = jnp.where(col_sum > 0, rcst_weight / jnp.maximum(col_sum, 1e-6), 0.0)
    wcoef = jnp.pad(mask_t * coef, ((0, 0), (0, pad_b)))[..., None]      # (T_dec, B_pad, 1)

    # fold i2h + h2h biases; cast matmul operands to bf16 (f32 accumulation in-kernel)
    e_wi = params["enc_wi"].astype(bf16)
    e_wh = params["enc_wh"].astype(bf16)
    e_bias = params["enc_bi"] + params["enc_bh"]
    d_wi = params["dec_wi"].astype(bf16)
    d_wh = params["dec_wh"].astype(bf16)
    d_bias = params["dec_bi"] + params["dec_bh"]
    r_wh = params["rcst_wh"].astype(bf16)

    # fuse the two decode-step matmuls that share h_d as LHS: [ logit | rcst i2h ]
    logit_w_pad = jnp.pad(params["logit_w"], ((0, 0), (0, Wp - W)))
    logit_b_pad = jnp.pad(params["logit_b"], ((0, 0), (0, Wp - W)),
                          constant_values=-1e9)        # padded vocab never wins softmax
    dfused_w = jnp.concatenate([logit_w_pad, params["rcst_wi"]], axis=1).astype(bf16)
    dfused_b = jnp.concatenate([logit_b_pad, params["rcst_bi"] + params["rcst_bh"]],
                               axis=1)

    p_w = params["h2preh_w"].astype(bf16)
    p_b = params["h2preh_b"]

    kernel_inputs = (enc_x, dec_x, wcoef,
                     e_wi, e_wh, e_bias,
                     d_wi, d_wh, d_bias,
                     dfused_w, dfused_b,
                     r_wh, p_w, p_b)

    # ---- BlockSpecs: time-streamed batch blocks; weights replicated/resident ----
    def _replicated_spec(shape):
        n = len(shape)
        return pl.BlockSpec(shape, lambda b, t: (0,) * n)

    in_specs = [
        pl.BlockSpec((T_enc, TB, E), lambda b, t: (0, b, 0)),    # enc_x (per batch block)
        pl.BlockSpec((1, TB, E), lambda b, t: (t, b, 0)),        # dec_x (per step)
        pl.BlockSpec((1, TB, 1), lambda b, t: (t, b, 0)),        # wcoef (per step)
        _replicated_spec((E, 4 * H)),        # e_wi
        _replicated_spec((H, 4 * H)),        # e_wh
        _replicated_spec((1, 4 * H)),        # e_bias
        _replicated_spec((E, 4 * H)),        # d_wi
        _replicated_spec((H, 4 * H)),        # d_wh
        _replicated_spec((1, 4 * H)),        # d_bias
        _replicated_spec((H, Wp + 4 * H)),   # dfused_w
        _replicated_spec((1, Wp + 4 * H)),   # dfused_b
        _replicated_spec((H, 4 * H)),        # r_wh
        _replicated_spec((H, H)),            # p_w
        _replicated_spec((1, H)),            # p_b
    ]
    out_specs = (
        # per-step logits tile: streamed to HBM, writeback overlapped with next step
        pl.BlockSpec((1, TB, Wp), lambda b, t: (t, b, 0)),
        # per-batch-block partial loss: resident across t, written back per block
        pl.BlockSpec((1, 1, H), lambda b, t: (b, 0, 0)),
    )
    scratch_shapes = [pltpu.VMEM((TB, H), jnp.float32)] * 5   # h_d, c_d, h_r, c_r, loss_acc

    out_shapes = (
        jax.ShapeDtypeStruct((T_dec, B_pad, Wp), logits_dtype),
        jax.ShapeDtypeStruct((B_blocks, 1, H), jnp.float32),
    )

    # ---- VMEM budget (double-buffered blocks + resident weights + scratch + temps) ----
    def _bytes(shape, dt):
        return int(math.prod(shape)) * jnp.dtype(dt).itemsize

    vmem_needed = 0
    vmem_needed += 2 * _bytes((T_enc, TB, E), bf16)            # enc_x block
    vmem_needed += 2 * _bytes((1, TB, E), bf16)                # dec_x block
    vmem_needed += 2 * _bytes((1, TB, 1), jnp.float32)         # wcoef block
    for arr in (e_wi, e_wh, e_bias, d_wi, d_wh, d_bias,
                dfused_w, dfused_b, r_wh, p_w, p_b):
        vmem_needed += 2 * int(arr.size) * jnp.dtype(arr.dtype).itemsize
    vmem_needed += 2 * _bytes((1, TB, Wp), logits_dtype)       # streamed logits tile
    vmem_needed += 2 * _bytes((1, 1, H), jnp.float32)          # partial-loss tile
    vmem_needed += 5 * _bytes((TB, H), jnp.float32)            # persistent state scratch
    vmem_needed += 4 * _bytes((TB, Wp + 4 * H), jnp.float32)   # fused / softmax temps

    try:
        vmem_cap = int(pltpu.get_tpu_info().vmem_capacity_bytes)
    except Exception:
        vmem_cap = 64 * 1024 * 1024                            # v7x physical (safe floor)
    vmem_limit = int(min(max(32 * 1024 * 1024, 2 * vmem_needed),
                         vmem_cap - vmem_cap // 8))

    # ---- advisory cost estimate for the XLA scheduler ----
    flops = 2 * B_pad * (
        T_enc * (E * 4 * H + H * 4 * H)
        + T_dec * (E * 4 * H + H * 4 * H + H * (Wp + 4 * H) + H * 4 * H + H * H))
    transcendentals = B_pad * (T_enc * 5 * H + T_dec * (10 * H + Wp))
    in_bytes = sum(int(x.size) * jnp.dtype(x.dtype).itemsize for x in kernel_inputs)
    out_bytes = sum(int(math.prod(s.shape)) * jnp.dtype(s.dtype).itemsize
                    for s in out_shapes)

    grid_spec = pltpu.PrefetchScalarGridSpec(
        num_scalar_prefetch=0,
        grid=(B_blocks, T_dec),
        in_specs=in_specs,
        out_specs=out_specs,
        scratch_shapes=scratch_shapes,
    )

    logits_tbw, loss_blocks = pl.pallas_call(
        functools.partial(ende_arnet_kernel, bf16_exp=bf16_exp),
        out_shape=out_shapes,
        grid_spec=grid_spec,
        compiler_params=pltpu.CompilerParams(
            dimension_semantics=("parallel", "arbitrary"),   # batch across cores (v7x)
            vmem_limit_bytes=vmem_limit,
        ),
        cost_estimate=pl.CostEstimate(flops=flops,
                                      transcendentals=transcendentals,
                                      bytes_accessed=in_bytes + out_bytes),
    )(*kernel_inputs)

    # slice off batch / vocab padding, back to (B, T_dec, word_cnt); sum partial losses
    decode_logit_seq = jnp.transpose(logits_tbw[:, :B, :W], (1, 0, 2))
    rcst_loss = jnp.sum(loss_blocks)
    return decode_logit_seq, rcst_loss


# ----------------------------------------------------------------------------
# Deterministic parameter construction (shapes follow the module __init__)
# ----------------------------------------------------------------------------
def make_params(key, token_cnt, word_cnt, lstm_size, input_encoding_size):
    E, H, W = input_encoding_size, lstm_size, word_cnt
    keys = jax.random.split(key, 16)

    def unif(k, shape, lo=-0.1, hi=0.1):
        return jax.random.uniform(k, shape, jnp.float32, lo, hi)

    params = {
        # nn.Embedding(token_cnt + 1, E), uniform(-0.1, 0.1)
        "embed": unif(keys[0], (token_cnt + 1, E)),
        # encode_lstm: i2h Linear(E, 4H), h2h Linear(H, 4H)   (stored (in, out))
        "enc_wi": unif(keys[1], (E, 4 * H)), "enc_bi": unif(keys[2], (1, 4 * H)),
        "enc_wh": unif(keys[3], (H, 4 * H)), "enc_bh": unif(keys[4], (1, 4 * H)),
        # decode_lstm
        "dec_wi": unif(keys[5], (E, 4 * H)), "dec_bi": unif(keys[6], (1, 4 * H)),
        "dec_wh": unif(keys[7], (H, 4 * H)), "dec_bh": unif(keys[8], (1, 4 * H)),
        # rcst_lstm: LSTMCore(H, H)
        "rcst_wi": unif(keys[9], (H, 4 * H)), "rcst_bi": unif(keys[10], (1, 4 * H)),
        "rcst_wh": unif(keys[11], (H, 4 * H)), "rcst_bh": unif(keys[12], (1, 4 * H)),
        # logit = Linear(H, word_cnt), weight uniform(-0.1,0.1), bias 0
        "logit_w": unif(keys[13], (H, W)), "logit_b": jnp.zeros((1, W), jnp.float32),
        # h_2_pre_h = Linear(H, H), weight uniform(-0.1,0.1), bias 0
        "h2preh_w": unif(keys[14], (H, H)), "h2preh_b": jnp.zeros((1, H), jnp.float32),
    }
    return params


if __name__ == "__main__":
    # small "opt" consistent with the module
    token_cnt = 20
    word_cnt = 48
    lstm_size = 32
    input_encoding_size = 32
    code_truncate = 6       # encode_time_step
    comment_truncate = 5    # decode_time_step
    reconstruct_weight = 0.5
    batch = 2

    key = jax.random.PRNGKey(0)
    pkey, k1, k2 = jax.random.split(key, 3)
    params = make_params(pkey, token_cnt, word_cnt, lstm_size, input_encoding_size)

    # token ids in [1, token_cnt] so no all-zero column triggers the (unmodeled) break
    code_matrix = jax.random.randint(k1, (batch, code_truncate), 1, token_cnt + 1, jnp.int32)
    comment_matrix = jax.random.randint(k2, (batch, comment_truncate), 1, token_cnt + 1, jnp.int32)
    comment_mask = jnp.ones((batch, comment_truncate), jnp.float32)

    fwd = jax.jit(functools.partial(encode_decode_arnet_forward,
                                    rcst_weight=reconstruct_weight))
    decode_logit_seq, rcst_loss = fwd(params, code_matrix, comment_matrix, comment_mask)
    jax.block_until_ready((decode_logit_seq, rcst_loss))

    assert decode_logit_seq.shape == (batch, comment_truncate, word_cnt)
    assert rcst_loss.shape == ()
    assert bool(jnp.isfinite(rcst_loss))
    assert bool(jnp.all(jnp.isfinite(decode_logit_seq)))
    print("KERNEL_OK")
</pallas_src>

<mosaic_0001>
module attributes {stable_mosaic.version = 11 : i64} {
  func.func @ende_arnet_kernel(%arg0: i32, %arg1: i32, %arg2: memref<6x16x32xbf16, #tpu.memory_space<vmem>>, %arg3: memref<1x16x32xbf16, #tpu.memory_space<vmem>>, %arg4: memref<1x16x1xf32, #tpu.memory_space<vmem>>, %arg5: memref<32x128xbf16, #tpu.memory_space<vmem>>, %arg6: memref<32x128xbf16, #tpu.memory_space<vmem>>, %arg7: memref<1x128xf32, #tpu.memory_space<vmem>>, %arg8: memref<32x128xbf16, #tpu.memory_space<vmem>>, %arg9: memref<32x128xbf16, #tpu.memory_space<vmem>>, %arg10: memref<1x128xf32, #tpu.memory_space<vmem>>, %arg11: memref<32x256xbf16, #tpu.memory_space<vmem>>, %arg12: memref<1x256xf32, #tpu.memory_space<vmem>>, %arg13: memref<32x128xbf16, #tpu.memory_space<vmem>>, %arg14: memref<32x32xbf16, #tpu.memory_space<vmem>>, %arg15: memref<1x32xf32, #tpu.memory_space<vmem>>, %arg16: memref<1x16x128xf32, #tpu.memory_space<vmem>>, %arg17: memref<1x1x32xf32, #tpu.memory_space<vmem>>, %arg18: memref<16x32xf32, #tpu.memory_space<vmem>>, %arg19: memref<16x32xf32, #tpu.memory_space<vmem>>, %arg20: memref<16x32xf32, #tpu.memory_space<vmem>>, %arg21: memref<16x32xf32, #tpu.memory_space<vmem>>, %arg22: memref<16x32xf32, #tpu.memory_space<vmem>>) attributes {dimension_semantics = [#tpu.dimension_semantics<parallel>, #tpu.dimension_semantics<arbitrary>], iteration_bounds = array<i64: 1, 5>, scalar_prefetch = 0 : i64, scratch_operands = 5 : i64, tpu.core_type = #tpu.core_type<tc>, window_params = [{transform_indices = @transform_0, window_bounds = array<i64: 6, 16, 32>}, {transform_indices = @transform_1, window_bounds = array<i64: 1, 16, 32>}, {transform_indices = @transform_2, window_bounds = array<i64: 1, 16, 1>}, {pipeline_mode = #tpu.pipeline_mode<synchronous>, transform_indices = @transform_3, window_bounds = array<i64: 32, 128>}, {pipeline_mode = #tpu.pipeline_mode<synchronous>, transform_indices = @transform_4, window_bounds = array<i64: 32, 128>}, {pipeline_mode = #tpu.pipeline_mode<synchronous>, transform_indices = @transform_5, window_bounds = array<i64: 1, 128>}, {pipeline_mode = #tpu.pipeline_mode<synchronous>, transform_indices = @transform_6, window_bounds = array<i64: 32, 128>}, {pipeline_mode = #tpu.pipeline_mode<synchronous>, transform_indices = @transform_7, window_bounds = array<i64: 32, 128>}, {pipeline_mode = #tpu.pipeline_mode<synchronous>, transform_indices = @transform_8, window_bounds = array<i64: 1, 128>}, {pipeline_mode = #tpu.pipeline_mode<synchronous>, transform_indices = @transform_9, window_bounds = array<i64: 32, 256>}, {pipeline_mode = #tpu.pipeline_mode<synchronous>, transform_indices = @transform_10, window_bounds = array<i64: 1, 256>}, {pipeline_mode = #tpu.pipeline_mode<synchronous>, transform_indices = @transform_11, window_bounds = array<i64: 32, 128>}, {pipeline_mode = #tpu.pipeline_mode<synchronous>, transform_indices = @transform_12, window_bounds = array<i64: 32, 32>}, {pipeline_mode = #tpu.pipeline_mode<synchronous>, transform_indices = @transform_13, window_bounds = array<i64: 1, 32>}, {transform_indices = @transform_14, window_bounds = array<i64: 1, 16, 128>}, {transform_indices = @transform_15, window_bounds = array<i64: 1, 1, 32>}]} {
    %c0_i32 = arith.constant 0 : i32
    %0 = arith.cmpi eq, %arg1, %c0_i32 : i32
    %1 = arith.extui %0 : i1 to i32
    %c0_i32_0 = arith.constant 0 : i32
    %2 = arith.cmpi ne, %1, %c0_i32_0 : i32
    scf.if %2 {
      %c0_58 = arith.constant 0 : index
      %c0_59 = arith.constant 0 : index
      %116 = vector.load %arg5[%c0_58, %c0_59] : memref<32x128xbf16, #tpu.memory_space<vmem>>, vector<32x128xbf16>
      %c0_60 = arith.constant 0 : index
      %c0_61 = arith.constant 0 : index
      %117 = vector.load %arg6[%c0_60, %c0_61] : memref<32x128xbf16, #tpu.memory_space<vmem>>, vector<32x128xbf16>
      %c0_62 = arith.constant 0 : index
      %c0_63 = arith.constant 0 : index
      %118 = vector.load %arg7[%c0_62, %c0_63] : memref<1x128xf32, #tpu.memory_space<vmem>>, vector<1x128xf32>
      %cst_64 = arith.constant 0.000000e+00 : f32
      %119 = vector.broadcast %cst_64 : f32 to vector<16x32xf32>
      %c0_i32_65 = arith.constant 0 : i32
      %120 = arith.index_cast %c0_i32_65 : i32 to index
      %c0_66 = arith.constant 0 : index
      %c0_67 = arith.constant 0 : index
      %121 = vector.load %arg2[%120, %c0_66, %c0_67] : memref<6x16x32xbf16, #tpu.memory_space<vmem>>, vector<1x16x32xbf16>
      %122 = vector.shape_cast %121 : vector<1x16x32xbf16> to vector<16x32xbf16>
      %cst_68 = arith.constant dense<0.000000e+00> : vector<16x128xf32>
      %123 = tpu.matmul %122, %116, %cst_68 {dimension_numbers = #tpu.dot_dimension_numbers<[1], [0], [0], [1], [0, 0, 1, 1], [], []>} : vector<16x32xbf16>, vector<32x128xbf16>, vector<16x128xf32> -> vector<16x128xf32>
      %124 = vector.broadcast %118 : vector<1x128xf32> to vector<16x128xf32>
      %125 = arith.addf %123, %124 : vector<16x128xf32>
      %126 = arith.truncf %119 : vector<16x32xf32> to vector<16x32xbf16>
      %cst_69 = arith.constant dense<0.000000e+00> : vector<16x128xf32>
      %127 = tpu.matmul %126, %117, %cst_69 {dimension_numbers = #tpu.dot_dimension_numbers<[1], [0], [0], [1], [0, 0, 1, 1], [], []>} : vector<16x32xbf16>, vector<32x128xbf16>, vector<16x128xf32> -> vector<16x128xf32>
      %128 = arith.addf %125, %127 : vector<16x128xf32>
      %129 = vector.extract_strided_slice %128 {offsets = [0, 0], sizes = [16, 32], strides = [1, 1]} : vector<16x128xf32> to vector<16x32xf32>
      %130 = arith.negf %129 : vector<16x32xf32>
      %131 = math.exp %130 : vector<16x32xf32>
      %cst_70 = arith.constant 1.000000e+00 : f32
      %132 = vector.broadcast %cst_70 : f32 to vector<16x32xf32>
      %133 = arith.addf %132, %131 : vector<16x32xf32>
      %134 = arith.divf %132, %133 : vector<16x32xf32>
      %135 = vector.extract_strided_slice %128 {offsets = [0, 32], sizes = [16, 32], strides = [1, 1]} : vector<16x128xf32> to vector<16x32xf32>
      %136 = arith.negf %135 : vector<16x32xf32>
      %137 = math.exp %136 : vector<16x32xf32>
      %cst_71 = arith.constant 1.000000e+00 : f32
      %138 = vector.broadcast %cst_71 : f32 to vector<16x32xf32>
      %139 = arith.addf %138, %137 : vector<16x32xf32>
      %140 = arith.divf %138, %139 : vector<16x32xf32>
      %141 = vector.extract_strided_slice %128 {offsets = [0, 64], sizes = [16, 32], strides = [1, 1]} : vector<16x128xf32> to vector<16x32xf32>
      %142 = arith.negf %141 : vector<16x32xf32>
      %143 = math.exp %142 : vector<16x32xf32>
      %cst_72 = arith.constant 1.000000e+00 : f32
      %144 = vector.broadcast %cst_72 : f32 to vector<16x32xf32>
      %145 = arith.addf %144, %143 : vector<16x32xf32>
      %146 = arith.divf %144, %145 : vector<16x32xf32>
      %147 = vector.extract_strided_slice %128 {offsets = [0, 96], sizes = [16, 32], strides = [1, 1]} : vector<16x128xf32> to vector<16x32xf32>
      %148 = math.tanh %147 : vector<16x32xf32>
      %149 = arith.mulf %140, %119 : vector<16x32xf32>
      %150 = arith.mulf %134, %148 : vector<16x32xf32>
      %151 = arith.addf %149, %150 : vector<16x32xf32>
      %152 = math.tanh %151 : vector<16x32xf32>
      %153 = arith.mulf %146, %152 : vector<16x32xf32>
      %c1_i32 = arith.constant 1 : i32
      %154 = arith.index_cast %c1_i32 : i32 to index
      %c0_73 = arith.constant 0 : index
      %c0_74 = arith.constant 0 : index
      %155 = vector.load %arg2[%154, %c0_73, %c0_74] : memref<6x16x32xbf16, #tpu.memory_space<vmem>>, vector<1x16x32xbf16>
      %156 = vector.shape_cast %155 : vector<1x16x32xbf16> to vector<16x32xbf16>
      %cst_75 = arith.constant dense<0.000000e+00> : vector<16x128xf32>
      %157 = tpu.matmul %156, %116, %cst_75 {dimension_numbers = #tpu.dot_dimension_numbers<[1], [0], [0], [1], [0, 0, 1, 1], [], []>} : vector<16x32xbf16>, vector<32x128xbf16>, vector<16x128xf32> -> vector<16x128xf32>
      %158 = vector.broadcast %118 : vector<1x128xf32> to vector<16x128xf32>
      %159 = arith.addf %157, %158 : vector<16x128xf32>
      %160 = arith.truncf %153 : vector<16x32xf32> to vector<16x32xbf16>
      %cst_76 = arith.constant dense<0.000000e+00> : vector<16x128xf32>
      %161 = tpu.matmul %160, %117, %cst_76 {dimension_numbers = #tpu.dot_dimension_numbers<[1], [0], [0], [1], [0, 0, 1, 1], [], []>} : vector<16x32xbf16>, vector<32x128xbf16>, vector<16x128xf32> -> vector<16x128xf32>
      %162 = arith.addf %159, %161 : vector<16x128xf32>
      %163 = vector.extract_strided_slice %162 {offsets = [0, 0], sizes = [16, 32], strides = [1, 1]} : vector<16x128xf32> to vector<16x32xf32>
      %164 = arith.negf %163 : vector<16x32xf32>
      %165 = math.exp %164 : vector<16x32xf32>
      %cst_77 = arith.constant 1.000000e+00 : f32
      %166 = vector.broadcast %cst_77 : f32 to vector<16x32xf32>
      %167 = arith.addf %166, %165 : vector<16x32xf32>
      %168 = arith.divf %166, %167 : vector<16x32xf32>
      %169 = vector.extract_strided_slice %162 {offsets = [0, 32], sizes = [16, 32], strides = [1, 1]} : vector<16x128xf32> to vector<16x32xf32>
      %170 = arith.negf %169 : vector<16x32xf32>
      %171 = math.exp %170 : vector<16x32xf32>
      %cst_78 = arith.constant 1.000000e+00 : f32
      %172 = vector.broadcast %cst_78 : f32 to vector<16x32xf32>
      %173 = arith.addf %172, %171 : vector<16x32xf32>
      %174 = arith.divf %172, %173 : vector<16x32xf32>
      %175 = vector.extract_strided_slice %162 {offsets = [0, 64], sizes = [16, 32], strides = [1, 1]} : vector<16x128xf32> to vector<16x32xf32>
      %176 = arith.negf %175 : vector<16x32xf32>
      %177 = math.exp %176 : vector<16x32xf32>
      %cst_79 = arith.constant 1.000000e+00 : f32
      %178 = vector.broadcast %cst_79 : f32 to vector<16x32xf32>
      %179 = arith.addf %178, %177 : vector<16x32xf32>
      %180 = arith.divf %178, %179 : vector<16x32xf32>
      %181 = vector.extract_strided_slice %162 {offsets = [0, 96], sizes = [16, 32], strides = [1, 1]} : vector<16x128xf32> to vector<16x32xf32>
      %182 = math.tanh %181 : vector<16x32xf32>
      %183 = arith.mulf %174, %151 : vector<16x32xf32>
      %184 = arith.mulf %168, %182 : vector<16x32xf32>
      %185 = arith.addf %183, %184 : vector<16x32xf32>
      %186 = math.tanh %185 : vector<16x32xf32>
      %187 = arith.mulf %180, %186 : vector<16x32xf32>
      %c2_i32 = arith.constant 2 : i32
      %188 = arith.index_cast %c2_i32 : i32 to index
      %c0_80 = arith.constant 0 : index
      %c0_81 = arith.constant 0 : index
      %189 = vector.load %arg2[%188, %c0_80, %c0_81] : memref<6x16x32xbf16, #tpu.memory_space<vmem>>, vector<1x16x32xbf16>
      %190 = vector.shape_cast %189 : vector<1x16x32xbf16> to vector<16x32xbf16>
      %cst_82 = arith.constant dense<0.000000e+00> : vector<16x128xf32>
      %191 = tpu.matmul %190, %116, %cst_82 {dimension_numbers = #tpu.dot_dimension_numbers<[1], [0], [0], [1], [0, 0, 1, 1], [], []>} : vector<16x32xbf16>, vector<32x128xbf16>, vector<16x128xf32> -> vector<16x128xf32>
      %192 = vector.broadcast %118 : vector<1x128xf32> to vector<16x128xf32>
      %193 = arith.addf %191, %192 : vector<16x128xf32>
      %194 = arith.truncf %187 : vector<16x32xf32> to vector<16x32xbf16>
      %cst_83 = arith.constant dense<0.000000e+00> : vector<16x128xf32>
      %195 = tpu.matmul %194, %117, %cst_83 {dimension_numbers = #tpu.dot_dimension_numbers<[1], [0], [0], [1], [0, 0, 1, 1], [], []>} : vector<16x32xbf16>, vector<32x128xbf16>, vector<16x128xf32> -> vector<16x128xf32>
      %196 = arith.addf %193, %195 : vector<16x128xf32>
      %197 = vector.extract_strided_slice %196 {offsets = [0, 0], sizes = [16, 32], strides = [1, 1]} : vector<16x128xf32> to vector<16x32xf32>
      %198 = arith.negf %197 : vector<16x32xf32>
      %199 = math.exp %198 : vector<16x32xf32>
      %cst_84 = arith.constant 1.000000e+00 : f32
      %200 = vector.broadcast %cst_84 : f32 to vector<16x32xf32>
      %201 = arith.addf %200, %199 : vector<16x32xf32>
      %202 = arith.divf %200, %201 : vector<16x32xf32>
      %203 = vector.extract_strided_slice %196 {offsets = [0, 32], sizes = [16, 32], strides = [1, 1]} : vector<16x128xf32> to vector<16x32xf32>
      %204 = arith.negf %203 : vector<16x32xf32>
      %205 = math.exp %204 : vector<16x32xf32>
      %cst_85 = arith.constant 1.000000e+00 : f32
      %206 = vector.broadcast %cst_85 : f32 to vector<16x32xf32>
      %207 = arith.addf %206, %205 : vector<16x32xf32>
      %208 = arith.divf %206, %207 : vector<16x32xf32>
      %209 = vector.extract_strided_slice %196 {offsets = [0, 64], sizes = [16, 32], strides = [1, 1]} : vector<16x128xf32> to vector<16x32xf32>
      %210 = arith.negf %209 : vector<16x32xf32>
      %211 = math.exp %210 : vector<16x32xf32>
      %cst_86 = arith.constant 1.000000e+00 : f32
      %212 = vector.broadcast %cst_86 : f32 to vector<16x32xf32>
      %213 = arith.addf %212, %211 : vector<16x32xf32>
      %214 = arith.divf %212, %213 : vector<16x32xf32>
      %215 = vector.extract_strided_slice %196 {offsets = [0, 96], sizes = [16, 32], strides = [1, 1]} : vector<16x128xf32> to vector<16x32xf32>
      %216 = math.tanh %215 : vector<16x32xf32>
      %217 = arith.mulf %208, %185 : vector<16x32xf32>
      %218 = arith.mulf %202, %216 : vector<16x32xf32>
      %219 = arith.addf %217, %218 : vector<16x32xf32>
      %220 = math.tanh %219 : vector<16x32xf32>
      %221 = arith.mulf %214, %220 : vector<16x32xf32>
      %c3_i32 = arith.constant 3 : i32
      %222 = arith.index_cast %c3_i32 : i32 to index
      %c0_87 = arith.constant 0 : index
      %c0_88 = arith.constant 0 : index
      %223 = vector.load %arg2[%222, %c0_87, %c0_88] : memref<6x16x32xbf16, #tpu.memory_space<vmem>>, vector<1x16x32xbf16>
      %224 = vector.shape_cast %223 : vector<1x16x32xbf16> to vector<16x32xbf16>
      %cst_89 = arith.constant dense<0.000000e+00> : vector<16x128xf32>
      %225 = tpu.matmul %224, %116, %cst_89 {dimension_numbers = #tpu.dot_dimension_numbers<[1], [0], [0], [1], [0, 0, 1, 1], [], []>} : vector<16x32xbf16>, vector<32x128xbf16>, vector<16x128xf32> -> vector<16x128xf32>
      %226 = vector.broadcast %118 : vector<1x128xf32> to vector<16x128xf32>
      %227 = arith.addf %225, %226 : vector<16x128xf32>
      %228 = arith.truncf %221 : vector<16x32xf32> to vector<16x32xbf16>
      %cst_90 = arith.constant dense<0.000000e+00> : vector<16x128xf32>
      %229 = tpu.matmul %228, %117, %cst_90 {dimension_numbers = #tpu.dot_dimension_numbers<[1], [0], [0], [1], [0, 0, 1, 1], [], []>} : vector<16x32xbf16>, vector<32x128xbf16>, vector<16x128xf32> -> vector<16x128xf32>
      %230 = arith.addf %227, %229 : vector<16x128xf32>
      %231 = vector.extract_strided_slice %230 {offsets = [0, 0], sizes = [16, 32], strides = [1, 1]} : vector<16x128xf32> to vector<16x32xf32>
      %232 = arith.negf %231 : vector<16x32xf32>
      %233 = math.exp %232 : vector<16x32xf32>
      %cst_91 = arith.constant 1.000000e+00 : f32
      %234 = vector.broadcast %cst_91 : f32 to vector<16x32xf32>
      %235 = arith.addf %234, %233 : vector<16x32xf32>
      %236 = arith.divf %234, %235 : vector<16x32xf32>
      %237 = vector.extract_strided_slice %230 {offsets = [0, 32], sizes = [16, 32], strides = [1, 1]} : vector<16x128xf32> to vector<16x32xf32>
      %238 = arith.negf %237 : vector<16x32xf32>
      %239 = math.exp %238 : vector<16x32xf32>
      %cst_92 = arith.constant 1.000000e+00 : f32
      %240 = vector.broadcast %cst_92 : f32 to vector<16x32xf32>
      %241 = arith.addf %240, %239 : vector<16x32xf32>
      %242 = arith.divf %240, %241 : vector<16x32xf32>
      %243 = vector.extract_strided_slice %230 {offsets = [0, 64], sizes = [16, 32], strides = [1, 1]} : vector<16x128xf32> to vector<16x32xf32>
      %244 = arith.negf %243 : vector<16x32xf32>
      %245 = math.exp %244 : vector<16x32xf32>
      %cst_93 = arith.constant 1.000000e+00 : f32
      %246 = vector.broadcast %cst_93 : f32 to vector<16x32xf32>
      %247 = arith.addf %246, %245 : vector<16x32xf32>
      %248 = arith.divf %246, %247 : vector<16x32xf32>
      %249 = vector.extract_strided_slice %230 {offsets = [0, 96], sizes = [16, 32], strides = [1, 1]} : vector<16x128xf32> to vector<16x32xf32>
      %250 = math.tanh %249 : vector<16x32xf32>
      %251 = arith.mulf %242, %219 : vector<16x32xf32>
      %252 = arith.mulf %236, %250 : vector<16x32xf32>
      %253 = arith.addf %251, %252 : vector<16x32xf32>
      %254 = math.tanh %253 : vector<16x32xf32>
      %255 = arith.mulf %248, %254 : vector<16x32xf32>
      %c4_i32_94 = arith.constant 4 : i32
      %256 = arith.index_cast %c4_i32_94 : i32 to index
      %c0_95 = arith.constant 0 : index
      %c0_96 = arith.constant 0 : index
      %257 = vector.load %arg2[%256, %c0_95, %c0_96] : memref<6x16x32xbf16, #tpu.memory_space<vmem>>, vector<1x16x32xbf16>
      %258 = vector.shape_cast %257 : vector<1x16x32xbf16> to vector<16x32xbf16>
      %cst_97 = arith.constant dense<0.000000e+00> : vector<16x128xf32>
      %259 = tpu.matmul %258, %116, %cst_97 {dimension_numbers = #tpu.dot_dimension_numbers<[1], [0], [0], [1], [0, 0, 1, 1], [], []>} : vector<16x32xbf16>, vector<32x128xbf16>, vector<16x128xf32> -> vector<16x128xf32>
      %260 = vector.broadcast %118 : vector<1x128xf32> to vector<16x128xf32>
      %261 = arith.addf %259, %260 : vector<16x128xf32>
      %262 = arith.truncf %255 : vector<16x32xf32> to vector<16x32xbf16>
      %cst_98 = arith.constant dense<0.000000e+00> : vector<16x128xf32>
      %263 = tpu.matmul %262, %117, %cst_98 {dimension_numbers = #tpu.dot_dimension_numbers<[1], [0], [0], [1], [0, 0, 1, 1], [], []>} : vector<16x32xbf16>, vector<32x128xbf16>, vector<16x128xf32> -> vector<16x128xf32>
      %264 = arith.addf %261, %263 : vector<16x128xf32>
      %265 = vector.extract_strided_slice %264 {offsets = [0, 0], sizes = [16, 32], strides = [1, 1]} : vector<16x128xf32> to vector<16x32xf32>
      %266 = arith.negf %265 : vector<16x32xf32>
      %267 = math.exp %266 : vector<16x32xf32>
      %cst_99 = arith.constant 1.000000e+00 : f32
      %268 = vector.broadcast %cst_99 : f32 to vector<16x32xf32>
      %269 = arith.addf %268, %267 : vector<16x32xf32>
      %270 = arith.divf %268, %269 : vector<16x32xf32>
      %271 = vector.extract_strided_slice %264 {offsets = [0, 32], sizes = [16, 32], strides = [1, 1]} : vector<16x128xf32> to vector<16x32xf32>
      %272 = arith.negf %271 : vector<16x32xf32>
      %273 = math.exp %272 : vector<16x32xf32>
      %cst_100 = arith.constant 1.000000e+00 : f32
      %274 = vector.broadcast %cst_100 : f32 to vector<16x32xf32>
      %275 = arith.addf %274, %273 : vector<16x32xf32>
      %276 = arith.divf %274, %275 : vector<16x32xf32>
      %277 = vector.extract_strided_slice %264 {offsets = [0, 64], sizes = [16, 32], strides = [1, 1]} : vector<16x128xf32> to vector<16x32xf32>
      %278 = arith.negf %277 : vector<16x32xf32>
      %279 = math.exp %278 : vector<16x32xf32>
      %cst_101 = arith.constant 1.000000e+00 : f32
      %280 = vector.broadcast %cst_101 : f32 to vector<16x32xf32>
      %281 = arith.addf %280, %279 : vector<16x32xf32>
      %282 = arith.divf %280, %281 : vector<16x32xf32>
      %283 = vector.extract_strided_slice %264 {offsets = [0, 96], sizes = [16, 32], strides = [1, 1]} : vector<16x128xf32> to vector<16x32xf32>
      %284 = math.tanh %283 : vector<16x32xf32>
      %285 = arith.mulf %276, %253 : vector<16x32xf32>
      %286 = arith.mulf %270, %284 : vector<16x32xf32>
      %287 = arith.addf %285, %286 : vector<16x32xf32>
      %288 = math.tanh %287 : vector<16x32xf32>
      %289 = arith.mulf %282, %288 : vector<16x32xf32>
      %c5_i32 = arith.constant 5 : i32
      %290 = arith.index_cast %c5_i32 : i32 to index
      %c0_102 = arith.constant 0 : index
      %c0_103 = arith.constant 0 : index
      %291 = vector.load %arg2[%290, %c0_102, %c0_103] : memref<6x16x32xbf16, #tpu.memory_space<vmem>>, vector<1x16x32xbf16>
      %292 = vector.shape_cast %291 : vector<1x16x32xbf16> to vector<16x32xbf16>
      %cst_104 = arith.constant dense<0.000000e+00> : vector<16x128xf32>
      %293 = tpu.matmul %292, %116, %cst_104 {dimension_numbers = #tpu.dot_dimension_numbers<[1], [0], [0], [1], [0, 0, 1, 1], [], []>} : vector<16x32xbf16>, vector<32x128xbf16>, vector<16x128xf32> -> vector<16x128xf32>
      %294 = vector.broadcast %118 : vector<1x128xf32> to vector<16x128xf32>
      %295 = arith.addf %293, %294 : vector<16x128xf32>
      %296 = arith.truncf %289 : vector<16x32xf32> to vector<16x32xbf16>
      %cst_105 = arith.constant dense<0.000000e+00> : vector<16x128xf32>
      %297 = tpu.matmul %296, %117, %cst_105 {dimension_numbers = #tpu.dot_dimension_numbers<[1], [0], [0], [1], [0, 0, 1, 1], [], []>} : vector<16x32xbf16>, vector<32x128xbf16>, vector<16x128xf32> -> vector<16x128xf32>
      %298 = arith.addf %295, %297 : vector<16x128xf32>
      %299 = vector.extract_strided_slice %298 {offsets = [0, 0], sizes = [16, 32], strides = [1, 1]} : vector<16x128xf32> to vector<16x32xf32>
      %300 = arith.negf %299 : vector<16x32xf32>
      %301 = math.exp %300 : vector<16x32xf32>
      %cst_106 = arith.constant 1.000000e+00 : f32
      %302 = vector.broadcast %cst_106 : f32 to vector<16x32xf32>
      %303 = arith.addf %302, %301 : vector<16x32xf32>
      %304 = arith.divf %302, %303 : vector<16x32xf32>
      %305 = vector.extract_strided_slice %298 {offsets = [0, 32], sizes = [16, 32], strides = [1, 1]} : vector<16x128xf32> to vector<16x32xf32>
      %306 = arith.negf %305 : vector<16x32xf32>
      %307 = math.exp %306 : vector<16x32xf32>
      %cst_107 = arith.constant 1.000000e+00 : f32
      %308 = vector.broadcast %cst_107 : f32 to vector<16x32xf32>
      %309 = arith.addf %308, %307 : vector<16x32xf32>
      %310 = arith.divf %308, %309 : vector<16x32xf32>
      %311 = vector.extract_strided_slice %298 {offsets = [0, 64], sizes = [16, 32], strides = [1, 1]} : vector<16x128xf32> to vector<16x32xf32>
      %312 = arith.negf %311 : vector<16x32xf32>
      %313 = math.exp %312 : vector<16x32xf32>
      %cst_108 = arith.constant 1.000000e+00 : f32
      %314 = vector.broadcast %cst_108 : f32 to vector<16x32xf32>
      %315 = arith.addf %314, %313 : vector<16x32xf32>
      %316 = arith.divf %314, %315 : vector<16x32xf32>
      %317 = vector.extract_strided_slice %298 {offsets = [0, 96], sizes = [16, 32], strides = [1, 1]} : vector<16x128xf32> to vector<16x32xf32>
      %318 = math.tanh %317 : vector<16x32xf32>
      %319 = arith.mulf %310, %287 : vector<16x32xf32>
      %320 = arith.mulf %304, %318 : vector<16x32xf32>
      %321 = arith.addf %319, %320 : vector<16x32xf32>
      %322 = math.tanh %321 : vector<16x32xf32>
      %323 = arith.mulf %316, %322 : vector<16x32xf32>
      %c6_i32 = arith.constant 6 : i32
      %c0_109 = arith.constant 0 : index
      %c0_110 = arith.constant 0 : index
      %324 = vector.load %arg18[%c0_109, %c0_110] : memref<16x32xf32, #tpu.memory_space<vmem>>, vector<16x32xf32>
      tpu.vector_store %arg18[%c0_109, %c0_110], %323 {strides = array<i32>} : memref<16x32xf32, #tpu.memory_space<vmem>>, vector<16x32xf32>,
      %c0_111 = arith.constant 0 : index
      %c0_112 = arith.constant 0 : index
      %325 = vector.load %arg19[%c0_111, %c0_112] : memref<16x32xf32, #tpu.memory_space<vmem>>, vector<16x32xf32>
      tpu.vector_store %arg19[%c0_111, %c0_112], %321 {strides = array<i32>} : memref<16x32xf32, #tpu.memory_space<vmem>>, vector<16x32xf32>,
      %c0_113 = arith.constant 0 : index
      %c0_114 = arith.constant 0 : index
      %326 = vector.load %arg20[%c0_113, %c0_114] : memref<16x32xf32, #tpu.memory_space<vmem>>, vector<16x32xf32>
      tpu.vector_store %arg20[%c0_113, %c0_114], %323 {strides = array<i32>} : memref<16x32xf32, #tpu.memory_space<vmem>>, vector<16x32xf32>,
      %c0_115 = arith.constant 0 : index
      %c0_116 = arith.constant 0 : index
      %327 = vector.load %arg21[%c0_115, %c0_116] : memref<16x32xf32, #tpu.memory_space<vmem>>, vector<16x32xf32>
      tpu.vector_store %arg21[%c0_115, %c0_116], %321 {strides = array<i32>} : memref<16x32xf32, #tpu.memory_space<vmem>>, vector<16x32xf32>,
      %cst_117 = arith.constant 0.000000e+00 : f32
      %328 = vector.broadcast %cst_117 : f32 to vector<16x32xf32>
      %c0_118 = arith.constant 0 : index
      %c0_119 = arith.constant 0 : index
      %329 = vector.load %arg22[%c0_118, %c0_119] : memref<16x32xf32, #tpu.memory_space<vmem>>, vector<16x32xf32>
      tpu.vector_store %arg22[%c0_118, %c0_119], %328 {strides = array<i32>} : memref<16x32xf32, #tpu.memory_space<vmem>>, vector<16x32xf32>,
    } else {
    }
    %c0 = arith.constant 0 : index
    %c0_1 = arith.constant 0 : index
    %3 = vector.load %arg8[%c0, %c0_1] : memref<32x128xbf16, #tpu.memory_space<vmem>>, vector<32x128xbf16>
    %c0_2 = arith.constant 0 : index
    %c0_3 = arith.constant 0 : index
    %4 = vector.load %arg9[%c0_2, %c0_3] : memref<32x128xbf16, #tpu.memory_space<vmem>>, vector<32x128xbf16>
    %c0_4 = arith.constant 0 : index
    %c0_5 = arith.constant 0 : index
    %5 = vector.load %arg10[%c0_4, %c0_5] : memref<1x128xf32, #tpu.memory_space<vmem>>, vector<1x128xf32>
    %c0_6 = arith.constant 0 : index
    %c0_7 = arith.constant 0 : index
    %6 = vector.load %arg11[%c0_6, %c0_7] : memref<32x256xbf16, #tpu.memory_space<vmem>>, vector<32x256xbf16>
    %c0_8 = arith.constant 0 : index
    %c0_9 = arith.constant 0 : index
    %7 = vector.load %arg12[%c0_8, %c0_9] : memref<1x256xf32, #tpu.memory_space<vmem>>, vector<1x256xf32>
    %c0_10 = arith.constant 0 : index
    %c0_11 = arith.constant 0 : index
    %8 = vector.load %arg13[%c0_10, %c0_11] : memref<32x128xbf16, #tpu.memory_space<vmem>>, vector<32x128xbf16>
    %c0_12 = arith.constant 0 : index
    %c0_13 = arith.constant 0 : index
    %9 = vector.load %arg14[%c0_12, %c0_13] : memref<32x32xbf16, #tpu.memory_space<vmem>>, vector<32x32xbf16>
    %c0_14 = arith.constant 0 : index
    %c0_15 = arith.constant 0 : index
    %10 = vector.load %arg15[%c0_14, %c0_15] : memref<1x32xf32, #tpu.memory_space<vmem>>, vector<1x32xf32>
    %c0_16 = arith.constant 0 : index
    %c0_17 = arith.constant 0 : index
    %11 = vector.load %arg18[%c0_16, %c0_17] : memref<16x32xf32, #tpu.memory_space<vmem>>, vector<16x32xf32>
    %c0_18 = arith.constant 0 : index
    %c0_19 = arith.constant 0 : index
    %12 = vector.load %arg19[%c0_18, %c0_19] : memref<16x32xf32, #tpu.memory_space<vmem>>, vector<16x32xf32>
    %c0_20 = arith.constant 0 : index
    %c0_21 = arith.constant 0 : index
    %c0_22 = arith.constant 0 : index
    %13 = vector.load %arg3[%c0_20, %c0_21, %c0_22] : memref<1x16x32xbf16, #tpu.memory_space<vmem>>, vector<1x16x32xbf16>
    %14 = vector.shape_cast %13 : vector<1x16x32xbf16> to vector<16x32xbf16>
    %cst = arith.constant dense<0.000000e+00> : vector<16x128xf32>
    %15 = tpu.matmul %14, %3, %cst {dimension_numbers = #tpu.dot_dimension_numbers<[1], [0], [0], [1], [0, 0, 1, 1], [], []>} : vector<16x32xbf16>, vector<32x128xbf16>, vector<16x128xf32> -> vector<16x128xf32>
    %16 = vector.broadcast %5 : vector<1x128xf32> to vector<16x128xf32>
    %17 = arith.addf %15, %16 : vector<16x128xf32>
    %18 = arith.truncf %11 : vector<16x32xf32> to vector<16x32xbf16>
    %cst_23 = arith.constant dense<0.000000e+00> : vector<16x128xf32>
    %19 = tpu.matmul %18, %4, %cst_23 {dimension_numbers = #tpu.dot_dimension_numbers<[1], [0], [0], [1], [0, 0, 1, 1], [], []>} : vector<16x32xbf16>, vector<32x128xbf16>, vector<16x128xf32> -> vector<16x128xf32>
    %20 = arith.addf %17, %19 : vector<16x128xf32>
    %21 = vector.extract_strided_slice %20 {offsets = [0, 0], sizes = [16, 32], strides = [1, 1]} : vector<16x128xf32> to vector<16x32xf32>
    %22 = arith.negf %21 : vector<16x32xf32>
    %23 = math.exp %22 : vector<16x32xf32>
    %cst_24 = arith.constant 1.000000e+00 : f32
    %24 = vector.broadcast %cst_24 : f32 to vector<16x32xf32>
    %25 = arith.addf %24, %23 : vector<16x32xf32>
    %26 = arith.divf %24, %25 : vector<16x32xf32>
    %27 = vector.extract_strided_slice %20 {offsets = [0, 32], sizes = [16, 32], strides = [1, 1]} : vector<16x128xf32> to vector<16x32xf32>
    %28 = arith.negf %27 : vector<16x32xf32>
    %29 = math.exp %28 : vector<16x32xf32>
    %cst_25 = arith.constant 1.000000e+00 : f32
    %30 = vector.broadcast %cst_25 : f32 to vector<16x32xf32>
    %31 = arith.addf %30, %29 : vector<16x32xf32>
    %32 = arith.divf %30, %31 : vector<16x32xf32>
    %33 = vector.extract_strided_slice %20 {offsets = [0, 64], sizes = [16, 32], strides = [1, 1]} : vector<16x128xf32> to vector<16x32xf32>
    %34 = arith.negf %33 : vector<16x32xf32>
    %35 = math.exp %34 : vector<16x32xf32>
    %cst_26 = arith.constant 1.000000e+00 : f32
    %36 = vector.broadcast %cst_26 : f32 to vector<16x32xf32>
    %37 = arith.addf %36, %35 : vector<16x32xf32>
    %38 = arith.divf %36, %37 : vector<16x32xf32>
    %39 = vector.extract_strided_slice %20 {offsets = [0, 96], sizes = [16, 32], strides = [1, 1]} : vector<16x128xf32> to vector<16x32xf32>
    %40 = math.tanh %39 : vector<16x32xf32>
    %41 = arith.mulf %32, %12 : vector<16x32xf32>
    %42 = arith.mulf %26, %40 : vector<16x32xf32>
    %43 = arith.addf %41, %42 : vector<16x32xf32>
    %44 = math.tanh %43 : vector<16x32xf32>
    %45 = arith.mulf %38, %44 : vector<16x32xf32>
    %c0_27 = arith.constant 0 : index
    %c0_28 = arith.constant 0 : index
    %46 = vector.load %arg18[%c0_27, %c0_28] : memref<16x32xf32, #tpu.memory_space<vmem>>, vector<16x32xf32>
    tpu.vector_store %arg18[%c0_27, %c0_28], %45 {strides = array<i32>} : memref<16x32xf32, #tpu.memory_space<vmem>>, vector<16x32xf32>,
    %c0_29 = arith.constant 0 : index
    %c0_30 = arith.constant 0 : index
    %47 = vector.load %arg19[%c0_29, %c0_30] : memref<16x32xf32, #tpu.memory_space<vmem>>, vector<16x32xf32>
    tpu.vector_store %arg19[%c0_29, %c0_30], %43 {strides = array<i32>} : memref<16x32xf32, #tpu.memory_space<vmem>>, vector<16x32xf32>,
    %48 = arith.truncf %45 : vector<16x32xf32> to vector<16x32xbf16>
    %cst_31 = arith.constant dense<0.000000e+00> : vector<16x256xf32>
    %49 = tpu.matmul %48, %6, %cst_31 {dimension_numbers = #tpu.dot_dimension_numbers<[1], [0], [0], [1], [0, 0, 1, 1], [], []>} : vector<16x32xbf16>, vector<32x256xbf16>, vector<16x256xf32> -> vector<16x256xf32>
    %50 = vector.broadcast %7 : vector<1x256xf32> to vector<16x256xf32>
    %51 = arith.addf %49, %50 : vector<16x256xf32>
    %52 = vector.extract_strided_slice %51 {offsets = [0, 0], sizes = [16, 128], strides = [1, 1]} : vector<16x256xf32> to vector<16x128xf32>
    %cst_32 = arith.constant dense<0xFF800000> : vector<16xf32>
    %53 = vector.multi_reduction <maximumf>, %52, %cst_32 [1] : vector<16x128xf32> to vector<16xf32>
    %54 = vector.shape_cast %53 : vector<16xf32> to vector<16x1xf32>
    %55 = vector.broadcast %54 : vector<16x1xf32> to vector<16x128xf32>
    %56 = arith.subf %52, %55 : vector<16x128xf32>
    %57 = math.exp %56 : vector<16x128xf32>
    %cst_33 = arith.constant dense<0.000000e+00> : vector<16xf32>
    %58 = vector.multi_reduction <add>, %57, %cst_33 [1] : vector<16x128xf32> to vector<16xf32>
    %59 = vector.shape_cast %58 : vector<16xf32> to vector<16x1xf32>
    %60 = math.log %59 : vector<16x1xf32>
    %61 = arith.addf %54, %60 : vector<16x1xf32>
    %62 = vector.broadcast %61 : vector<16x1xf32> to vector<16x128xf32>
    %63 = arith.subf %52, %62 : vector<16x128xf32>
    %c0_34 = arith.constant 0 : index
    %c0_35 = arith.constant 0 : index
    %c0_36 = arith.constant 0 : index
    %64 = vector.load %arg16[%c0_34, %c0_35, %c0_36] : memref<1x16x128xf32, #tpu.memory_space<vmem>>, vector<1x16x128xf32>
    %65 = vector.shape_cast %64 : vector<1x16x128xf32> to vector<16x128xf32>
    %66 = vector.shape_cast %63 : vector<16x128xf32> to vector<1x16x128xf32>
    tpu.vector_store %arg16[%c0_34, %c0_35, %c0_36], %66 {strides = array<i32>} : memref<1x16x128xf32, #tpu.memory_space<vmem>>, vector<1x16x128xf32>,
    %67 = vector.extract_strided_slice %51 {offsets = [0, 128], sizes = [16, 128], strides = [1, 1]} : vector<16x256xf32> to vector<16x128xf32>
    %c0_37 = arith.constant 0 : index
    %c0_38 = arith.constant 0 : index
    %68 = vector.load %arg20[%c0_37, %c0_38] : memref<16x32xf32, #tpu.memory_space<vmem>>, vector<16x32xf32>
    %c0_39 = arith.constant 0 : index
    %c0_40 = arith.constant 0 : index
    %69 = vector.load %arg21[%c0_39, %c0_40] : memref<16x32xf32, #tpu.memory_space<vmem>>, vector<16x32xf32>
    %70 = arith.truncf %68 : vector<16x32xf32> to vector<16x32xbf16>
    %cst_41 = arith.constant dense<0.000000e+00> : vector<16x128xf32>
    %71 = tpu.matmul %70, %8, %cst_41 {dimension_numbers = #tpu.dot_dimension_numbers<[1], [0], [0], [1], [0, 0, 1, 1], [], []>} : vector<16x32xbf16>, vector<32x128xbf16>, vector<16x128xf32> -> vector<16x128xf32>
    %72 = arith.addf %67, %71 : vector<16x128xf32>
    %73 = vector.extract_strided_slice %72 {offsets = [0, 0], sizes = [16, 32], strides = [1, 1]} : vector<16x128xf32> to vector<16x32xf32>
    %74 = arith.negf %73 : vector<16x32xf32>
    %75 = math.exp %74 : vector<16x32xf32>
    %cst_42 = arith.constant 1.000000e+00 : f32
    %76 = vector.broadcast %cst_42 : f32 to vector<16x32xf32>
    %77 = arith.addf %76, %75 : vector<16x32xf32>
    %78 = arith.divf %76, %77 : vector<16x32xf32>
    %79 = vector.extract_strided_slice %72 {offsets = [0, 32], sizes = [16, 32], strides = [1, 1]} : vector<16x128xf32> to vector<16x32xf32>
    %80 = arith.negf %79 : vector<16x32xf32>
    %81 = math.exp %80 : vector<16x32xf32>
    %cst_43 = arith.constant 1.000000e+00 : f32
    %82 = vector.broadcast %cst_43 : f32 to vector<16x32xf32>
    %83 = arith.addf %82, %81 : vector<16x32xf32>
    %84 = arith.divf %82, %83 : vector<16x32xf32>
    %85 = vector.extract_strided_slice %72 {offsets = [0, 64], sizes = [16, 32], strides = [1, 1]} : vector<16x128xf32> to vector<16x32xf32>
    %86 = arith.negf %85 : vector<16x32xf32>
    %87 = math.exp %86 : vector<16x32xf32>
    %cst_44 = arith.constant 1.000000e+00 : f32
    %88 = vector.broadcast %cst_44 : f32 to vector<16x32xf32>
    %89 = arith.addf %88, %87 : vector<16x32xf32>
    %90 = arith.divf %88, %89 : vector<16x32xf32>
    %91 = vector.extract_strided_slice %72 {offsets = [0, 96], sizes = [16, 32], strides = [1, 1]} : vector<16x128xf32> to vector<16x32xf32>
    %92 = math.tanh %91 : vector<16x32xf32>
    %93 = arith.mulf %84, %69 : vector<16x32xf32>
    %94 = arith.mulf %78, %92 : vector<16x32xf32>
    %95 = arith.addf %93, %94 : vector<16x32xf32>
    %96 = math.tanh %95 : vector<16x32xf32>
    %97 = arith.mulf %90, %96 : vector<16x32xf32>
    %c0_45 = arith.constant 0 : index
    %c0_46 = arith.constant 0 : index
    %98 = vector.load %arg20[%c0_45, %c0_46] : memref<16x32xf32, #tpu.memory_space<vmem>>, vector<16x32xf32>
    tpu.vector_store %arg20[%c0_45, %c0_46], %97 {strides = array<i32>} : memref<16x32xf32, #tpu.memory_space<vmem>>, vector<16x32xf32>,
    %c0_47 = arith.constant 0 : index
    %c0_48 = arith.constant 0 : index
    %99 = vector.load %arg21[%c0_47, %c0_48] : memref<16x32xf32, #tpu.memory_space<vmem>>, vector<16x32xf32>
    tpu.vector_store %arg21[%c0_47, %c0_48], %95 {strides = array<i32>} : memref<16x32xf32, #tpu.memory_space<vmem>>, vector<16x32xf32>,
    %100 = arith.truncf %97 : vector<16x32xf32> to vector<16x32xbf16>
    %cst_49 = arith.constant dense<0.000000e+00> : vector<16x32xf32>
    %101 = tpu.matmul %100, %9, %cst_49 {dimension_numbers = #tpu.dot_dimension_numbers<[1], [0], [0], [1], [0, 0, 1, 1], [], []>} : vector<16x32xbf16>, vector<32x32xbf16>, vector<16x32xf32> -> vector<16x32xf32>
    %102 = vector.broadcast %10 : vector<1x32xf32> to vector<16x32xf32>
    %103 = arith.addf %101, %102 : vector<16x32xf32>
    %104 = arith.subf %103, %11 : vector<16x32xf32>
    %c0_50 = arith.constant 0 : index
    %c0_51 = arith.constant 0 : index
    %105 = vector.load %arg22[%c0_50, %c0_51] : memref<16x32xf32, #tpu.memory_space<vmem>>, vector<16x32xf32>
    %106 = arith.mulf %104, %104 : vector<16x32xf32>
    %c0_52 = arith.constant 0 : index
    %c0_53 = arith.constant 0 : index
    %c0_54 = arith.constant 0 : index
    %107 = vector.load %arg4[%c0_52, %c0_53, %c0_54] : memref<1x16x1xf32, #tpu.memory_space<vmem>>, vector<1x16x1xf32>
    %108 = vector.shape_cast %107 : vector<1x16x1xf32> to vector<16x1xf32>
    %109 = vector.broadcast %108 : vector<16x1xf32> to vector<16x32xf32>
    %110 = arith.mulf %106, %109 : vector<16x32xf32>
    %111 = arith.addf %105, %110 : vector<16x32xf32>
    %c0_55 = arith.constant 0 : index
    %c0_56 = arith.constant 0 : index
    %112 = vector.load %arg22[%c0_55, %c0_56] : memref<16x32xf32, #tpu.memory_space<vmem>>, vector<16x32xf32>
    tpu.vector_store %arg22[%c0_55, %c0_56], %111 {strides = array<i32>} : memref<16x32xf32, #tpu.memory_space<vmem>>, vector<16x32xf32>,
    %c4_i32 = arith.constant 4 : i32
    %113 = arith.cmpi eq, %arg1, %c4_i32 : i32
    %114 = arith.extui %113 : i1 to i32
    %c0_i32_57 = arith.constant 0 : i32
    %115 = arith.cmpi ne, %114, %c0_i32_57 : i32
    scf.if %115 {
      %c0_58 = arith.constant 0 : index
      %c0_59 = arith.constant 0 : index
      %116 = vector.load %arg22[%c0_58, %c0_59] : memref<16x32xf32, #tpu.memory_space<vmem>>, vector<16x32xf32>
      %cst_60 = arith.constant dense<0.000000e+00> : vector<32xf32>
      %117 = vector.multi_reduction <add>, %116, %cst_60 [0] : vector<16x32xf32> to vector<32xf32>
      %118 = vector.shape_cast %117 : vector<32xf32> to vector<1x32xf32>
      %c0_61 = arith.constant 0 : index
      %c0_62 = arith.constant 0 : index
      %c0_63 = arith.constant 0 : index
      %119 = vector.load %arg17[%c0_61, %c0_62, %c0_63] : memref<1x1x32xf32, #tpu.memory_space<vmem>>, vector<1x1x32xf32>
      %120 = vector.shape_cast %119 : vector<1x1x32xf32> to vector<1x32xf32>
      %121 = vector.shape_cast %118 : vector<1x32xf32> to vector<1x1x32xf32>
      tpu.vector_store %arg17[%c0_61, %c0_62, %c0_63], %121 {strides = array<i32>} : memref<1x1x32xf32, #tpu.memory_space<vmem>>, vector<1x1x32xf32>,
    } else {
    }
    return
  }
  func.func @transform_0(%arg0: i32, %arg1: i32) -> (i32, i32, i32) {
    %c0_i32 = arith.constant 0 : i32
    %c0_i32_0 = arith.constant 0 : i32
    %c0_i32_1 = arith.constant 0 : i32
    return %c0_i32, %arg0, %c0_i32_0 : i32, i32, i32
  }
  func.func @transform_1(%arg0: i32, %arg1: i32) -> (i32, i32, i32) {
    %c0_i32 = arith.constant 0 : i32
    %c0_i32_0 = arith.constant 0 : i32
    return %arg1, %arg0, %c0_i32 : i32, i32, i32
  }
  func.func @transform_2(%arg0: i32, %arg1: i32) -> (i32, i32, i32) {
    %c0_i32 = arith.constant 0 : i32
    %c0_i32_0 = arith.constant 0 : i32
    return %arg1, %arg0, %c0_i32 : i32, i32, i32
  }
  func.func @transform_3(%arg0: i32, %arg1: i32) -> (i32, i32) {
    %c0_i32 = arith.constant 0 : i32
    %c0_i32_0 = arith.constant 0 : i32
    %c0_i32_1 = arith.constant 0 : i32
    return %c0_i32, %c0_i32_0 : i32, i32
  }
  func.func @transform_4(%arg0: i32, %arg1: i32) -> (i32, i32) {
    %c0_i32 = arith.constant 0 : i32
    %c0_i32_0 = arith.constant 0 : i32
    %c0_i32_1 = arith.constant 0 : i32
    return %c0_i32, %c0_i32_0 : i32, i32
  }
  func.func @transform_5(%arg0: i32, %arg1: i32) -> (i32, i32) {
    %c0_i32 = arith.constant 0 : i32
    %c0_i32_0 = arith.constant 0 : i32
    %c0_i32_1 = arith.constant 0 : i32
    return %c0_i32, %c0_i32_0 : i32, i32
  }
  func.func @transform_6(%arg0: i32, %arg1: i32) -> (i32, i32) {
    %c0_i32 = arith.constant 0 : i32
    %c0_i32_0 = arith.constant 0 : i32
    %c0_i32_1 = arith.constant 0 : i32
    return %c0_i32, %c0_i32_0 : i32, i32
  }
  func.func @transform_7(%arg0: i32, %arg1: i32) -> (i32, i32) {
    %c0_i32 = arith.constant 0 : i32
    %c0_i32_0 = arith.constant 0 : i32
    %c0_i32_1 = arith.constant 0 : i32
    return %c0_i32, %c0_i32_0 : i32, i32
  }
  func.func @transform_8(%arg0: i32, %arg1: i32) -> (i32, i32) {
    %c0_i32 = arith.constant 0 : i32
    %c0_i32_0 = arith.constant 0 : i32
    %c0_i32_1 = arith.constant 0 : i32
    return %c0_i32, %c0_i32_0 : i32, i32
  }
  func.func @transform_9(%arg0: i32, %arg1: i32) -> (i32, i32) {
    %c0_i32 = arith.constant 0 : i32
    %c0_i32_0 = arith.constant 0 : i32
    %c0_i32_1 = arith.constant 0 : i32
    return %c0_i32, %c0_i32_0 : i32, i32
  }
  func.func @transform_10(%arg0: i32, %arg1: i32) -> (i32, i32) {
    %c0_i32 = arith.constant 0 : i32
    %c0_i32_0 = arith.constant 0 : i32
    %c0_i32_1 = arith.constant 0 : i32
    return %c0_i32, %c0_i32_0 : i32, i32
  }
  func.func @transform_11(%arg0: i32, %arg1: i32) -> (i32, i32) {
    %c0_i32 = arith.constant 0 : i32
    %c0_i32_0 = arith.constant 0 : i32
    %c0_i32_1 = arith.constant 0 : i32
    return %c0_i32, %c0_i32_0 : i32, i32
  }
  func.func @transform_12(%arg0: i32, %arg1: i32) -> (i32, i32) {
    %c0_i32 = arith.constant 0 : i32
    %c0_i32_0 = arith.constant 0 : i32
    %c0_i32_1 = arith.constant 0 : i32
    return %c0_i32, %c0_i32_0 : i32, i32
  }
  func.func @transform_13(%arg0: i32, %arg1: i32) -> (i32, i32) {
    %c0_i32 = arith.constant 0 : i32
    %c0_i32_0 = arith.constant 0 : i32
    %c0_i32_1 = arith.constant 0 : i32
    return %c0_i32, %c0_i32_0 : i32, i32
  }
  func.func @transform_14(%arg0: i32, %arg1: i32) -> (i32, i32, i32) {
    %c0_i32 = arith.constant 0 : i32
    %c0_i32_0 = arith.constant 0 : i32
    return %arg1, %arg0, %c0_i32 : i32, i32, i32
  }
  func.func @transform_15(%arg0: i32, %arg1: i32) -> (i32, i32, i32) {
    %c0_i32 = arith.constant 0 : i32
    %c0_i32_0 = arith.constant 0 : i32
    %c0_i32_1 = arith.constant 0 : i32
    return %arg0, %c0_i32, %c0_i32_0 : i32, i32, i32
  }
}

</mosaic_0001>

<llo_original>
// kernel: encode_decode_arnet_forward.1
$region0: #{encode_decode_arnet_forward.1}
  #allocation0 [shape = 'u32[]', space=smem, size = 0x4, offset = 0x4, fixed_abs, tag = 'smem constant byte address 0x4 - core index']
  #allocation1 [shape = 'u32[144,128]{1,0:T(1,128)}', space=vmem, size = 0x12000, scoped, tag = 'internal scratch']
  #allocation2 [shape = 'f32[16,32]{1,0:T(8,128)}', space=vmem, size = 0x2000, scoped, tag = 'scratch operand']
  #allocation3 [shape = 'f32[16,32]{1,0:T(8,128)}', space=vmem, size = 0x2000, scoped, tag = 'scratch operand']
  #allocation4 [shape = 'f32[16,32]{1,0:T(8,128)}', space=vmem, size = 0x2000, scoped, tag = 'scratch operand']
  #allocation5 [shape = 'f32[16,32]{1,0:T(8,128)}', space=vmem, size = 0x2000, scoped, tag = 'scratch operand']
  #allocation6 [shape = 'f32[16,32]{1,0:T(8,128)}', space=vmem, size = 0x2000, scoped, tag = 'scratch operand']
  %s0 = inlined_call_operand.vmem [shape: bf16[6,16,32], index: 0, kind: input, shape index: {}]
  %s1 = inlined_call_operand.vmem [shape: bf16[5,16,32], index: 1, kind: input, shape index: {}]
  %s2 = inlined_call_operand.vmem [shape: f32[5,16,1], index: 2, kind: input, shape index: {}]
  %s3 = inlined_call_operand.vmem [shape: bf16[32,128], index: 3, kind: input, shape index: {}]
  %s4 = inlined_call_operand.vmem [shape: bf16[32,128], index: 4, kind: input, shape index: {}]
  %s5 = inlined_call_operand.vmem [shape: f32[1,128], index: 5, kind: input, shape index: {}]
  %s6 = inlined_call_operand.vmem [shape: bf16[32,128], index: 6, kind: input, shape index: {}]
  %s7 = inlined_call_operand.vmem [shape: bf16[32,128], index: 7, kind: input, shape index: {}]
  %s8 = inlined_call_operand.vmem [shape: f32[1,128], index: 8, kind: input, shape index: {}]
  %s9 = inlined_call_operand.vmem [shape: bf16[32,256], index: 9, kind: input, shape index: {}]
  %s10 = inlined_call_operand.vmem [shape: f32[1,256], index: 10, kind: input, shape index: {}]
  %s11 = inlined_call_operand.vmem [shape: bf16[32,128], index: 11, kind: input, shape index: {}]
  %s12 = inlined_call_operand.vmem [shape: bf16[32,32], index: 12, kind: input, shape index: {}]
  %s13 = inlined_call_operand.vmem [shape: f32[1,32], index: 13, kind: input, shape index: {}]
  %s14 = inlined_call_operand.vmem [shape: f32[5,16,128], index: 14, kind: output, shape index: {0}]
  %s15 = inlined_call_operand.vmem [shape: f32[1,1,32], index: 15, kind: output, shape index: {1}]
  %16 = xla_tuple %s14, %s15
  %s17 = sld [smem:[#allocation0]]
  $region105: #{encode_decode_arnet_forward.1} parent=0
    _
  %s19 = ssub.s32 1, %s17
  %s20 = scalar_select 0, %s19, %s17
  loop: start=0, step=1, limit=7
  $region2: #{encode_decode_arnet_forward.1} parent=0 // loop_pre_header
    _
  $region3: #{encode_decode_arnet_forward.1} parent=0 // loop_header
    %s22 = sphi 0, %s26
    %p23 = scmp.ge.s32.totalorder %s22, 7
    %s29 = sphi 0, %s41
    %s30 = sphi 0, %s37
    %s31 = sphi 0, %s29
    %s32 = sphi 0, %s30
    %s33 = sphi 0, %s31
    %s34 = sphi 0, %s32
    %s44 = sphi 0, %s46
    %s47 = sphi 0, %s44
    %s48 = sphi 0, %s47
    %s64 = sphi 0, %s48
    %s72 = sphi 0, %s74
    %s75 = sphi 0, %s72
    %s76 = sphi 0, %s75
    %s92 = sphi 0, %s76
    %s100 = sphi 0, %s102
    %s103 = sphi 0, %s100
    %s104 = sphi 0, %s103
    %s120 = sphi 0, %s104
    %s124 = sphi 0, %s124
    %s126 = sphi 0, %s124
    %s127 = sphi 0, %s126
    %s141 = sphi 0, %s127
    %s145 = sphi 0, %s145
    %s147 = sphi 0, %s145
    %s148 = sphi 0, %s147
    %s162 = sphi 0, %s148
    %s166 = sphi 0, %s166
    %s168 = sphi 0, %s166
    %s169 = sphi 0, %s168
    %s183 = sphi 0, %s169
    %s187 = sphi 0, %s187
    %s189 = sphi 0, %s187
    %s190 = sphi 0, %s189
    %s204 = sphi 0, %s190
    %s208 = sphi 0, %s208
    %s210 = sphi 0, %s208
    %s211 = sphi 0, %s210
    %s225 = sphi 0, %s211
    %s229 = sphi 0, %s229
    %s231 = sphi 0, %s229
    %s232 = sphi 0, %s231
    %s246 = sphi 0, %s232
    %s250 = sphi 0, %s250
    %s252 = sphi 0, %s250
    %s253 = sphi 0, %s252
    %s267 = sphi 0, %s253
    %s271 = sphi 0, %s271
    %s273 = sphi 0, %s271
    %s274 = sphi 0, %s273
    %s288 = sphi 0, %s274
    %s292 = sphi 0, %s292
    %s294 = sphi 0, %s292
    %s295 = sphi 0, %s294
    %s309 = sphi 0, %s295
    %s313 = sphi 0, %s313
    %s315 = sphi 0, %s313
    %s316 = sphi 0, %s315
    %s330 = sphi 0, %s316
    %s334 = sphi 0, %s334
    %s336 = sphi 0, %s334
    %s337 = sphi 0, %s336
    %s351 = sphi 0, %s337
    %s359 = sphi 0, %s361
    %s362 = sphi 0, %s359
    %s363 = sphi 0, %s362
    %s379 = sphi 0, %s363
    %s385 = sphi 0, %s387
    %s388 = sphi 0, %s385
    %s389 = sphi 0, %s388
    %s405 = sphi 0, %s389
  $region4: #{encode_decode_arnet_forward.1} parent=0 // loop_header_branch
    %25 = sbr.rel (%p23) target = $region8
  $region5: #{encode_decode_arnet_forward.1} parent=0 // loop_body
    %s27 = ssub.s32 %s22, 1
    %s28 = ssub.s32 %s22, 2
    %s35 = sadd.s32 1, %s30
    %p36 = scmp.ge.s32.totalorder %s35, 5
    %s37 = scalar_select %p36, 0, %s35
    %s38 = sadd.s32 1, %s29
    %s39 = scalar_select %p36, %s38, %s29
    %p40 = scmp.ge.s32.totalorder %s39, 1
    %s41 = scalar_select %p40, 0, %s39
    %s42 = ssub.s32 %s29, %s41
    %p43 = scmp.eq.s32.totalorder %s42, 0
    %s45 = sadd.s32 %s44, 1
    %s46 = scalar_select %p43, %s44, %s45
    %p49 = pneg %p43
    %p50 = scmp.eq.s32.totalorder %s22, 4
    %p51 = por %p49, %p50
    %p52 = scmp.ne.s32.totalorder %s44, %s47
    %p53 = scmp.eq.s32.totalorder %s22, 0
    %p54 = por %p52, %p53
    %p55 = scmp.ne.s32.totalorder %s44, %s47
    %p56 = scmp.eq.s32.totalorder %s27, 4
    %p57 = por %p55, %p56
    %p58 = scmp.ne.s32.totalorder %s47, %s48
    %p59 = scmp.eq.s32.totalorder %s27, 0
    %p60 = por %p58, %p59
    %p61 = scmp.ne.s32.totalorder %s47, %s48
    %p62 = scmp.eq.s32.totalorder %s28, 4
    %p63 = por %p61, %p62
    %p65 = scmp.ne.s32.totalorder %s48, %s64
    %p66 = scmp.eq.s32.totalorder %s28, 0
    %p67 = por %p65, %p66
    %s68 = ssub.s32 %s30, %s37
    %s69 = ssub.s32 %s29, %s41
    %s70 = sor.u32 %s68, %s69
    %p71 = scmp.eq.s32.totalorder %s70, 0
    %s73 = sadd.s32 %s72, 1
    %s74 = scalar_select %p71, %s72, %s73
    %p77 = pneg %p71
    %p78 = scmp.eq.s32.totalorder %s22, 4
    %p79 = por %p77, %p78
    %p80 = scmp.ne.s32.totalorder %s72, %s75
    %p81 = scmp.eq.s32.totalorder %s22, 0
    %p82 = por %p80, %p81
    %p83 = scmp.ne.s32.totalorder %s72, %s75
    %p84 = scmp.eq.s32.totalorder %s27, 4
    %p85 = por %p83, %p84
    %p86 = scmp.ne.s32.totalorder %s75, %s76
    %p87 = scmp.eq.s32.totalorder %s27, 0
    %p88 = por %p86, %p87
    %p89 = scmp.ne.s32.totalorder %s75, %s76
    %p90 = scmp.eq.s32.totalorder %s28, 4
    %p91 = por %p89, %p90
    %p93 = scmp.ne.s32.totalorder %s76, %s92
    %p94 = scmp.eq.s32.totalorder %s28, 0
    %p95 = por %p93, %p94
    %s96 = ssub.s32 %s30, %s37
    %s97 = ssub.s32 %s29, %s41
    %s98 = sor.u32 %s96, %s97
    %p99 = scmp.eq.s32.totalorder %s98, 0
    %s101 = sadd.s32 %s100, 1
    %s102 = scalar_select %p99, %s100, %s101
    %p105 = pneg %p99
    %p106 = scmp.eq.s32.totalorder %s22, 4
    %p107 = por %p105, %p106
    %p108 = scmp.ne.s32.totalorder %s100, %s103
    %p109 = scmp.eq.s32.totalorder %s22, 0
    %p110 = por %p108, %p109
    %p111 = scmp.ne.s32.totalorder %s100, %s103
    %p112 = scmp.eq.s32.totalorder %s27, 4
    %p113 = por %p111, %p112
    %p114 = scmp.ne.s32.totalorder %s103, %s104
    %p115 = scmp.eq.s32.totalorder %s27, 0
    %p116 = por %p114, %p115
    %p117 = scmp.ne.s32.totalorder %s103, %s104
    %p118 = scmp.eq.s32.totalorder %s28, 4
    %p119 = por %p117, %p118
    %p121 = scmp.ne.s32.totalorder %s104, %s120
    %p122 = scmp.eq.s32.totalorder %s28, 0
    %p123 = por %p121, %p122
    %s125 = sadd.s32 %s124, 1
    %p128 = scmp.eq.s32.totalorder %s22, 4
    %p129 = scmp.ne.s32.totalorder %s124, %s126
    %p130 = scmp.eq.s32.totalorder %s22, 0
    %p131 = por %p129, %p130
    %p132 = scmp.ne.s32.totalorder %s124, %s126
    %p133 = scmp.eq.s32.totalorder %s27, 4
    %p134 = por %p132, %p133
    %p135 = scmp.ne.s32.totalorder %s126, %s127
    %p136 = scmp.eq.s32.totalorder %s27, 0
    %p137 = por %p135, %p136
    %p138 = scmp.ne.s32.totalorder %s126, %s127
    %p139 = scmp.eq.s32.totalorder %s28, 4
    %p140 = por %p138, %p139
    %p142 = scmp.ne.s32.totalorder %s127, %s141
    %p143 = scmp.eq.s32.totalorder %s28, 0
    %p144 = por %p142, %p143
    %s146 = sadd.s32 %s145, 1
    %p149 = scmp.eq.s32.totalorder %s22, 4
    %p150 = scmp.ne.s32.totalorder %s145, %s147
    %p151 = scmp.eq.s32.totalorder %s22, 0
    %p152 = por %p150, %p151
    %p153 = scmp.ne.s32.totalorder %s145, %s147
    %p154 = scmp.eq.s32.totalorder %s27, 4
    %p155 = por %p153, %p154
    %p156 = scmp.ne.s32.totalorder %s147, %s148
    %p157 = scmp.eq.s32.totalorder %s27, 0
    %p158 = por %p156, %p157
    %p159 = scmp.ne.s32.totalorder %s147, %s148
    %p160 = scmp.eq.s32.totalorder %s28, 4
    %p161 = por %p159, %p160
    %p163 = scmp.ne.s32.totalorder %s148, %s162
    %p164 = scmp.eq.s32.totalorder %s28, 0
    %p165 = por %p163, %p164
    %s167 = sadd.s32 %s166, 1
    %p170 = scmp.eq.s32.totalorder %s22, 4
    %p171 = scmp.ne.s32.totalorder %s166, %s168
    %p172 = scmp.eq.s32.totalorder %s22, 0
    %p173 = por %p171, %p172
    %p174 = scmp.ne.s32.totalorder %s166, %s168
    %p175 = scmp.eq.s32.totalorder %s27, 4
    %p176 = por %p174, %p175
    %p177 = scmp.ne.s32.totalorder %s168, %s169
    %p178 = scmp.eq.s32.totalorder %s27, 0
    %p179 = por %p177, %p178
    %p180 = scmp.ne.s32.totalorder %s168, %s169
    %p181 = scmp.eq.s32.totalorder %s28, 4
    %p182 = por %p180, %p181
    %p184 = scmp.ne.s32.totalorder %s169, %s183
    %p185 = scmp.eq.s32.totalorder %s28, 0
    %p186 = por %p184, %p185
    %s188 = sadd.s32 %s187, 1
    %p191 = scmp.eq.s32.totalorder %s22, 4
    %p192 = scmp.ne.s32.totalorder %s187, %s189
    %p193 = scmp.eq.s32.totalorder %s22, 0
    %p194 = por %p192, %p193
    %p195 = scmp.ne.s32.totalorder %s187, %s189
    %p196 = scmp.eq.s32.totalorder %s27, 4
    %p197 = por %p195, %p196
    %p198 = scmp.ne.s32.totalorder %s189, %s190
    %p199 = scmp.eq.s32.totalorder %s27, 0
    %p200 = por %p198, %p199
    %p201 = scmp.ne.s32.totalorder %s189, %s190
    %p202 = scmp.eq.s32.totalorder %s28, 4
    %p203 = por %p201, %p202
    %p205 = scmp.ne.s32.totalorder %s190, %s204
    %p206 = scmp.eq.s32.totalorder %s28, 0
    %p207 = por %p205, %p206
    %s209 = sadd.s32 %s208, 1
    %p212 = scmp.eq.s32.totalorder %s22, 4
    %p213 = scmp.ne.s32.totalorder %s208, %s210
    %p214 = scmp.eq.s32.totalorder %s22, 0
    %p215 = por %p213, %p214
    %p216 = scmp.ne.s32.totalorder %s208, %s210
    %p217 = scmp.eq.s32.totalorder %s27, 4
    %p218 = por %p216, %p217
    %p219 = scmp.ne.s32.totalorder %s210, %s211
    %p220 = scmp.eq.s32.totalorder %s27, 0
    %p221 = por %p219, %p220
    %p222 = scmp.ne.s32.totalorder %s210, %s211
    %p223 = scmp.eq.s32.totalorder %s28, 4
    %p224 = por %p222, %p223
    %p226 = scmp.ne.s32.totalorder %s211, %s225
    %p227 = scmp.eq.s32.totalorder %s28, 0
    %p228 = por %p226, %p227
    %s230 = sadd.s32 %s229, 1
    %p233 = scmp.eq.s32.totalorder %s22, 4
    %p234 = scmp.ne.s32.totalorder %s229, %s231
    %p235 = scmp.eq.s32.totalorder %s22, 0
    %p236 = por %p234, %p235
    %p237 = scmp.ne.s32.totalorder %s229, %s231
    %p238 = scmp.eq.s32.totalorder %s27, 4
    %p239 = por %p237, %p238
    %p240 = scmp.ne.s32.totalorder %s231, %s232
    %p241 = scmp.eq.s32.totalorder %s27, 0
    %p242 = por %p240, %p241
    %p243 = scmp.ne.s32.totalorder %s231, %s232
    %p244 = scmp.eq.s32.totalorder %s28, 4
    %p245 = por %p243, %p244
    %p247 = scmp.ne.s32.totalorder %s232, %s246
    %p248 = scmp.eq.s32.totalorder %s28, 0
    %p249 = por %p247, %p248
    %s251 = sadd.s32 %s250, 1
    %p254 = scmp.eq.s32.totalorder %s22, 4
    %p255 = scmp.ne.s32.totalorder %s250, %s252
    %p256 = scmp.eq.s32.totalorder %s22, 0
    %p257 = por %p255, %p256
    %p258 = scmp.ne.s32.totalorder %s250, %s252
    %p259 = scmp.eq.s32.totalorder %s27, 4
    %p260 = por %p258, %p259
    %p261 = scmp.ne.s32.totalorder %s252, %s253
    %p262 = scmp.eq.s32.totalorder %s27, 0
    %p263 = por %p261, %p262
    %p264 = scmp.ne.s32.totalorder %s252, %s253
    %p265 = scmp.eq.s32.totalorder %s28, 4
    %p266 = por %p264, %p265
    %p268 = scmp.ne.s32.totalorder %s253, %s267
    %p269 = scmp.eq.s32.totalorder %s28, 0
    %p270 = por %p268, %p269
    %s272 = sadd.s32 %s271, 1
    %p275 = scmp.eq.s32.totalorder %s22, 4
    %p276 = scmp.ne.s32.totalorder %s271, %s273
    %p277 = scmp.eq.s32.totalorder %s22, 0
    %p278 = por %p276, %p277
    %p279 = scmp.ne.s32.totalorder %s271, %s273
    %p280 = scmp.eq.s32.totalorder %s27, 4
    %p281 = por %p279, %p280
    %p282 = scmp.ne.s32.totalorder %s273, %s274
    %p283 = scmp.eq.s32.totalorder %s27, 0
    %p284 = por %p282, %p283
    %p285 = scmp.ne.s32.totalorder %s273, %s274
    %p286 = scmp.eq.s32.totalorder %s28, 4
    %p287 = por %p285, %p286
    %p289 = scmp.ne.s32.totalorder %s274, %s288
    %p290 = scmp.eq.s32.totalorder %s28, 0
    %p291 = por %p289, %p290
    %s293 = sadd.s32 %s292, 1
    %p296 = scmp.eq.s32.totalorder %s22, 4
    %p297 = scmp.ne.s32.totalorder %s292, %s294
    %p298 = scmp.eq.s32.totalorder %s22, 0
    %p299 = por %p297, %p298
    %p300 = scmp.ne.s32.totalorder %s292, %s294
    %p301 = scmp.eq.s32.totalorder %s27, 4
    %p302 = por %p300, %p301
    %p303 = scmp.ne.s32.totalorder %s294, %s295
    %p304 = scmp.eq.s32.totalorder %s27, 0
    %p305 = por %p303, %p304
    %p306 = scmp.ne.s32.totalorder %s294, %s295
    %p307 = scmp.eq.s32.totalorder %s28, 4
    %p308 = por %p306, %p307
    %p310 = scmp.ne.s32.totalorder %s295, %s309
    %p311 = scmp.eq.s32.totalorder %s28, 0
    %p312 = por %p310, %p311
    %s314 = sadd.s32 %s313, 1
    %p317 = scmp.eq.s32.totalorder %s22, 4
    %p318 = scmp.ne.s32.totalorder %s313, %s315
    %p319 = scmp.eq.s32.totalorder %s22, 0
    %p320 = por %p318, %p319
    %p321 = scmp.ne.s32.totalorder %s313, %s315
    %p322 = scmp.eq.s32.totalorder %s27, 4
    %p323 = por %p321, %p322
    %p324 = scmp.ne.s32.totalorder %s315, %s316
    %p325 = scmp.eq.s32.totalorder %s27, 0
    %p326 = por %p324, %p325
    %p327 = scmp.ne.s32.totalorder %s315, %s316
    %p328 = scmp.eq.s32.totalorder %s28, 4
    %p329 = por %p327, %p328
    %p331 = scmp.ne.s32.totalorder %s316, %s330
    %p332 = scmp.eq.s32.totalorder %s28, 0
    %p333 = por %p331, %p332
    %s335 = sadd.s32 %s334, 1
    %p338 = scmp.eq.s32.totalorder %s22, 4
    %p339 = scmp.ne.s32.totalorder %s334, %s336
    %p340 = scmp.eq.s32.totalorder %s22, 0
    %p341 = por %p339, %p340
    %p342 = scmp.ne.s32.totalorder %s334, %s336
    %p343 = scmp.eq.s32.totalorder %s27, 4
    %p344 = por %p342, %p343
    %p345 = scmp.ne.s32.totalorder %s336, %s337
    %p346 = scmp.eq.s32.totalorder %s27, 0
    %p347 = por %p345, %p346
    %p348 = scmp.ne.s32.totalorder %s336, %s337
    %p349 = scmp.eq.s32.totalorder %s28, 4
    %p350 = por %p348, %p349
    %p352 = scmp.ne.s32.totalorder %s337, %s351
    %p353 = scmp.eq.s32.totalorder %s28, 0
    %p354 = por %p352, %p353
    %s355 = ssub.s32 %s30, %s37
    %s356 = ssub.s32 %s29, %s41
    %s357 = sor.u32 %s355, %s356
    %p358 = scmp.eq.s32.totalorder %s357, 0
    %s360 = sadd.s32 %s359, 1
    %s361 = scalar_select %p358, %s359, %s360
    %p364 = pneg %p358
    %p365 = scmp.eq.s32.totalorder %s22, 4
    %p366 = por %p364, %p365
    %p367 = scmp.ne.s32.totalorder %s359, %s362
    %p368 = scmp.eq.s32.totalorder %s22, 0
    %p369 = por %p367, %p368
    %p370 = scmp.ne.s32.totalorder %s359, %s362
    %p371 = scmp.eq.s32.totalorder %s27, 4
    %p372 = por %p370, %p371
    %p373 = scmp.ne.s32.totalorder %s362, %s363
    %p374 = scmp.eq.s32.totalorder %s27, 0
    %p375 = por %p373, %p374
    %p376 = scmp.ne.s32.totalorder %s362, %s363
    %p377 = scmp.eq.s32.totalorder %s28, 4
    %p378 = por %p376, %p377
    %p380 = scmp.ne.s32.totalorder %s363, %s379
    %p381 = scmp.eq.s32.totalorder %s28, 0
    %p382 = por %p380, %p381
    %s383 = ssub.s32 %s29, %s41
    %p384 = scmp.eq.s32.totalorder %s383, 0
    %s386 = sadd.s32 %s385, 1
    %s387 = scalar_select %p384, %s385, %s386
    %p390 = pneg %p384
    %p391 = scmp.eq.s32.totalorder %s22, 4
    %p392 = por %p390, %p391
    %p393 = scmp.ne.s32.totalorder %s385, %s388
    %p394 = scmp.eq.s32.totalorder %s22, 0
    %p395 = por %p393, %p394
    %p396 = scmp.ne.s32.totalorder %s385, %s388
    %p397 = scmp.eq.s32.totalorder %s27, 4
    %p398 = por %p396, %p397
    %p399 = scmp.ne.s32.totalorder %s388, %s389
    %p400 = scmp.eq.s32.totalorder %s27, 0
    %p401 = por %p399, %p400
    %p402 = scmp.ne.s32.totalorder %s388, %s389
    %p403 = scmp.eq.s32.totalorder %s28, 4
    %p404 = por %p402, %p403
    %p406 = scmp.ne.s32.totalorder %s389, %s405
    %p407 = scmp.eq.s32.totalorder %s28, 0
    %p408 = por %p406, %p407
    %p409 = scmp.le.s32.totalorder 1, %s22
    %p410 = scmp.lt.s32.totalorder %s22, 6
    %p411 = pnand %p409, %p410
    %p412 = pneg %p411
    // Predicated region
    $region9: #{encode_decode_arnet_forward.1} parent=5 // pred_check
      _
    $region10: #{encode_decode_arnet_forward.1} parent=5 // pred_check_branch
      %414 = sbr.rel (%p411) target = $region12
    $region11: #{encode_decode_arnet_forward.1} parent=5 // pred_region
      %s415 = ssub.s32 %s22, 1
      // Predicated region
      $region13: #{encode_decode_arnet_forward.1} parent=11 // pred_check
        %p416 = pneg %p60
      $region14: #{encode_decode_arnet_forward.1} parent=11 // pred_check_branch
        %418 = sbr.rel (%p416) target = $region16
      $region15: #{encode_decode_arnet_forward.1} parent=11 // pred_region
        %s419 = smul.u32 2, %s31
        %p420 = scmp.lt.s32.totalorder %s419, 1
        %s421 = scalar_select %p420, %s419, 1
        %s422 = smul.addr %s421, 4
        %s423 = scalar_lea.vmem %s0, %s422
        %s424 = smul.u32 2, %s31
      $region16: #{encode_decode_arnet_forward.1} parent=11 // pred_fallthru
        _
      // Predicated region
      $region17: #{encode_decode_arnet_forward.1} parent=11 // pred_check
        %p425 = pneg %p137
      $region18: #{encode_decode_arnet_forward.1} parent=11 // pred_check_branch
        %427 = sbr.rel (%p425) target = $region20
      $region19: #{encode_decode_arnet_forward.1} parent=11 // pred_region
        _
      $region20: #{encode_decode_arnet_forward.1} parent=11 // pred_fallthru
        _
      // Predicated region
      $region21: #{encode_decode_arnet_forward.1} parent=11 // pred_check
        %p428 = pneg %p158
      $region22: #{encode_decode_arnet_forward.1} parent=11 // pred_check_branch
        %430 = sbr.rel (%p428) target = $region24
      $region23: #{encode_decode_arnet_forward.1} parent=11 // pred_region
        _
      $region24: #{encode_decode_arnet_forward.1} parent=11 // pred_fallthru
        _
      // Predicated region
      $region25: #{encode_decode_arnet_forward.1} parent=11 // pred_check
        %p431 = pneg %p179
      $region26: #{encode_decode_arnet_forward.1} parent=11 // pred_check_branch
        %433 = sbr.rel (%p431) target = $region28
      $region27: #{encode_decode_arnet_forward.1} parent=11 // pred_region
        _
      $region28: #{encode_decode_arnet_forward.1} parent=11 // pred_fallthru
        _
      // Predicated region
      $region29: #{encode_decode_arnet_forward.1} parent=11 // pred_check
        %p434 = pneg %p200
      $region30: #{encode_decode_arnet_forward.1} parent=11 // pred_check_branch
        %436 = sbr.rel (%p434) target = $region32
      $region31: #{encode_decode_arnet_forward.1} parent=11 // pred_region
        _
      $region32: #{encode_decode_arnet_forward.1} parent=11 // pred_fallthru
        _
      // Predicated region
      $region33: #{encode_decode_arnet_forward.1} parent=11 // pred_check
        %p437 = pneg %p221
      $region34: #{encode_decode_arnet_forward.1} parent=11 // pred_check_branch
        %439 = sbr.rel (%p437) target = $region36
      $region35: #{encode_decode_arnet_forward.1} parent=11 // pred_region
        _
      $region36: #{encode_decode_arnet_forward.1} parent=11 // pred_fallthru
        _
      // Predicated region
      $region37: #{encode_decode_arnet_forward.1} parent=11 // pred_check
        %p440 = pneg %p242
      $region38: #{encode_decode_arnet_forward.1} parent=11 // pred_check_branch
        %442 = sbr.rel (%p440) target = $region40
      $region39: #{encode_decode_arnet_forward.1} parent=11 // pred_region
        _
      $region40: #{encode_decode_arnet_forward.1} parent=11 // pred_fallthru
        _
      // Predicated region
      $region41: #{encode_decode_arnet_forward.1} parent=11 // pred_check
        %p443 = pneg %p263
      $region42: #{encode_decode_arnet_forward.1} parent=11 // pred_check_branch
        %445 = sbr.rel (%p443) target = $region44
      $region43: #{encode_decode_arnet_forward.1} parent=11 // pred_region
        _
      $region44: #{encode_decode_arnet_forward.1} parent=11 // pred_fallthru
        _
      // Predicated region
      $region45: #{encode_decode_arnet_forward.1} parent=11 // pred_check
        %p446 = pneg %p284
      $region46: #{encode_decode_arnet_forward.1} parent=11 // pred_check_branch
        %448 = sbr.rel (%p446) target = $region48
      $region47: #{encode_decode_arnet_forward.1} parent=11 // pred_region
        _
      $region48: #{encode_decode_arnet_forward.1} parent=11 // pred_fallthru
        _
      // Predicated region
      $region49: #{encode_decode_arnet_forward.1} parent=11 // pred_check
        %p449 = pneg %p305
      $region50: #{encode_decode_arnet_forward.1} parent=11 // pred_check_branch
        %451 = sbr.rel (%p449) target = $region52
      $region51: #{encode_decode_arnet_forward.1} parent=11 // pred_region
        _
      $region52: #{encode_decode_arnet_forward.1} parent=11 // pred_fallthru
        _
      // Predicated region
      $region53: #{encode_decode_arnet_forward.1} parent=11 // pred_check
        %p452 = pneg %p326
      $region54: #{encode_decode_arnet_forward.1} parent=11 // pred_check_branch
        %454 = sbr.rel (%p452) target = $region56
      $region55: #{encode_decode_arnet_forward.1} parent=11 // pred_region
        _
      $region56: #{encode_decode_arnet_forward.1} parent=11 // pred_fallthru
        _
      // Predicated region
      $region57: #{encode_decode_arnet_forward.1} parent=11 // pred_check
        %p455 = pneg %p347
      $region58: #{encode_decode_arnet_forward.1} parent=11 // pred_check_branch
        %457 = sbr.rel (%p455) target = $region60
      $region59: #{encode_decode_arnet_forward.1} parent=11 // pred_region
        _
      $region60: #{encode_decode_arnet_forward.1} parent=11 // pred_fallthru
        _
    $region12: #{encode_decode_arnet_forward.1} parent=5 // pred_fallthru
      _
    %p458 = scmp.lt.s32.totalorder %s22, 5
    // Predicated region
    $region61: #{encode_decode_arnet_forward.1} parent=5 // pred_check
      %p459 = pneg %p458
    $region62: #{encode_decode_arnet_forward.1} parent=5 // pred_check_branch
      %461 = sbr.rel (%p459) target = $region64
    $region63: #{encode_decode_arnet_forward.1} parent=5 // pred_region
      // Predicated region
      $region65: #{encode_decode_arnet_forward.1} parent=63 // pred_check
        %p462 = pneg %p82
      $region66: #{encode_decode_arnet_forward.1} parent=63 // pred_check_branch
        %464 = sbr.rel (%p462) target = $region68
      $region67: #{encode_decode_arnet_forward.1} parent=63 // pred_region
        %s465 = smul.u32 2, %s29
        %p466 = scmp.lt.s32.totalorder %s30, 4
        %s467 = scalar_select %p466, %s30, 4
        %p468 = scmp.lt.s32.totalorder %s465, 1
        %s469 = scalar_select %p468, %s465, 1
        %s470 = smul.addr %s467, 2
        %s471 = sadd.s32 %s469, %s470
        %s472 = smul.addr %s471, 4
        %s473 = scalar_lea.vmem %s1, %s472
        %s474 = smul.u32 2, %s29
      $region68: #{encode_decode_arnet_forward.1} parent=63 // pred_fallthru
        _
      // Predicated region
      $region69: #{encode_decode_arnet_forward.1} parent=63 // pred_check
        %p475 = pneg %p110
      $region70: #{encode_decode_arnet_forward.1} parent=63 // pred_check_branch
        %477 = sbr.rel (%p475) target = $region72
      $region71: #{encode_decode_arnet_forward.1} parent=63 // pred_region
        %s478 = smul.u32 2, %s29
        %p479 = scmp.lt.s32.totalorder %s30, 4
        %s480 = scalar_select %p479, %s30, 4
        %p481 = scmp.lt.s32.totalorder %s478, 1
        %s482 = scalar_select %p481, %s478, 1
        %s483 = smul.addr %s480, 2
        %s484 = sadd.s32 %s482, %s483
        %s485 = smul.addr %s484, 8
        %s486 = scalar_lea.vmem %s2, %s485
        %s487 = smul.u32 2, %s29
      $region72: #{encode_decode_arnet_forward.1} parent=63 // pred_fallthru
        _
    $region64: #{encode_decode_arnet_forward.1} parent=5 // pred_fallthru
      _
    %p488 = scmp.le.s32.totalorder 1, %s22
    %p489 = scmp.lt.s32.totalorder %s22, 6
    %p490 = pnand %p488, %p489
    %p491 = pneg %p490
    // Predicated region
    $region73: #{encode_decode_arnet_forward.1} parent=5 // pred_check
      _
    $region74: #{encode_decode_arnet_forward.1} parent=5 // pred_check_branch
      %493 = sbr.rel (%p490) target = $region76
    $region75: #{encode_decode_arnet_forward.1} parent=5 // pred_region
      %s494 = ssub.s32 %s22, 1
      %s495 = smul.u32 2, %s31
      %p496 = scmp.lt.s32.totalorder %s495, 1
      %s497 = scalar_select %p496, %s495, 1
      %s498 = smul.addr %s497, 4
      %s499 = scalar_lea.vmem %s0, %s498
      %p500 = pneg %p60
      %p501 = pneg %p57
      %s502 = smul.u32 2, %s31
      %p503 = scmp.lt.s32.totalorder %s32, 4
      %s504 = scalar_select %p503, %s32, 4
      %p505 = scmp.lt.s32.totalorder %s502, 1
      %s506 = scalar_select %p505, %s502, 1
      %s507 = smul.addr %s504, 2
      %s508 = sadd.s32 %s506, %s507
      %s509 = smul.addr %s508, 4
      %s510 = scalar_lea.vmem %s1, %s509
      %p511 = pneg %p88
      %p512 = pneg %p85
      %s513 = smul.u32 2, %s31
      %p514 = scmp.lt.s32.totalorder %s32, 4
      %s515 = scalar_select %p514, %s32, 4
      %p516 = scmp.lt.s32.totalorder %s513, 1
      %s517 = scalar_select %p516, %s513, 1
      %s518 = smul.addr %s515, 2
      %s519 = sadd.s32 %s517, %s518
      %s520 = smul.addr %s519, 8
      %s521 = scalar_lea.vmem %s2, %s520
      %p522 = pneg %p116
      %p523 = pneg %p113
      %p524 = pneg %p137
      %p525 = pneg %p134
      %p526 = pneg %p158
      %p527 = pneg %p155
      %p528 = pneg %p179
      %p529 = pneg %p176
      %p530 = pneg %p200
      %p531 = pneg %p197
      %p532 = pneg %p221
      %p533 = pneg %p218
      %p534 = pneg %p242
      %p535 = pneg %p239
      %p536 = pneg %p263
      %p537 = pneg %p260
      %p538 = pneg %p284
      %p539 = pneg %p281
      %p540 = pneg %p305
      %p541 = pneg %p302
      %p542 = pneg %p326
      %p543 = pneg %p323
      %p544 = pneg %p347
      %p545 = pneg %p344
      %p546 = pneg %p375
      %p547 = pneg %p372
      %s548 = smul.u32 2, %s31
      %p549 = scmp.lt.s32.totalorder %s32, 4
      %s550 = scalar_select %p549, %s32, 4
      %p551 = scmp.lt.s32.totalorder %s548, 1
      %s552 = scalar_select %p551, %s548, 1
      %s553 = smul.addr %s550, 2
      %s554 = sadd.s32 %s552, %s553
      %s555 = smul.addr %s554, 8
      %s556 = scalar_lea.vmem %s14, %s555
      %p557 = pneg %p401
      %p558 = pneg %p398
      %p559 = scmp.lt.s32.totalorder %s31, 0
      %s560 = scalar_select %p559, %s31, 0
      %s561 = scalar_lea.vmem %s15, %s560
      %s562 = smul.u32 2, %s31
      %p563 = scmp.lt.s32.totalorder %s562, 1
      %s564 = scalar_select %p563, %s562, 1
      %s565 = smul.addr %s564, 4
      %s566 = scalar_lea.vmem %s0, %s565
      %s567 = smul.u32 2, %s31
      %s568 = smul.u32 2, %s31
      %p569 = scmp.lt.s32.totalorder %s32, 4
      %s570 = scalar_select %p569, %s32, 4
      %p571 = scmp.lt.s32.totalorder %s568, 1
      %s572 = scalar_select %p571, %s568, 1
      %s573 = smul.addr %s570, 2
      %s574 = sadd.s32 %s572, %s573
      %s575 = smul.addr %s574, 4
      %s576 = scalar_lea.vmem %s1, %s575
      %s577 = smul.u32 2, %s31
      %s578 = smul.u32 2, %s31
      %p579 = scmp.lt.s32.totalorder %s32, 4
      %s580 = scalar_select %p579, %s32, 4
      %p581 = scmp.lt.s32.totalorder %s578, 1
      %s582 = scalar_select %p581, %s578, 1
      %s583 = smul.addr %s580, 2
      %s584 = sadd.s32 %s582, %s583
      %s585 = smul.addr %s584, 8
      %s586 = scalar_lea.vmem %s2, %s585
      %s587 = smul.u32 2, %s31
      %s588 = smul.u32 2, %s31
      %p589 = scmp.lt.s32.totalorder %s32, 4
      %s590 = scalar_select %p589, %s32, 4
      %p591 = scmp.lt.s32.totalorder %s588, 1
      %s592 = scalar_select %p591, %s588, 1
      %s593 = smul.addr %s590, 2
      %s594 = sadd.s32 %s592, %s593
      %s595 = smul.addr %s594, 8
      %s596 = scalar_lea.vmem %s14, %s595
      %s597 = smul.u32 2, %s31
      %p598 = scmp.lt.s32.totalorder %s31, 0
      %s599 = scalar_select %p598, %s31, 0
      %s600 = scalar_lea.vmem %s15, %s599
      %p602 = scmp.eq.s32.totalorder %s32, 0
      // Predicated region
      $region77: #{encode_decode_arnet_forward.1} parent=75 // pred_check
        %p603 = pneg %p602
      $region78: #{encode_decode_arnet_forward.1} parent=75 // pred_check_branch
        %605 = sbr.rel (%p603) target = $region80
      $region79: #{encode_decode_arnet_forward.1} parent=75 // pred_region
        %v606 = vld [vmem:[%s3] sm:$0xf]
        %v607 = vld [vmem:[%s3 + $0x4] sm:$0xf]
        %v608 = vld [vmem:[%s3 + $0x8] sm:$0xf]
        %v609 = vld [vmem:[%s3 + $0xc] sm:$0xf]
        %v610 = vld [vmem:[%s4] sm:$0xf]
        %v611 = vld [vmem:[%s4 + $0x4] sm:$0xf]
        %v612 = vld [vmem:[%s4 + $0x8] sm:$0xf]
        %v613 = vld [vmem:[%s4 + $0xc] sm:$0xf]
        %v614 = vld [vmem:[%s5] sm:$0x1]
        %v615 = vld [vmem:[%s566] sm:$0xf]
        %v616 = vld [vmem:[%s566 + $0x4] sm:$0xf]
        %v618 = vlaneseq
        %v619 = vshrl.u32 %v618, 7
        %v620 = vsub.s32 0, %v619
        %v621 = vrot.slane %v614, %v620
        %v625 = vunpack.c.l.b16 %v615
        %v626 = vunpack.c.l.b16 %v616
        %v627 = vpack.c.b16 %v626, %v625
        %v632 = vunpack.c.l.b16 %v606
        %v633 = vunpack.c.l.b16 %v607
        %v634 = vunpack.c.l.b16 %v608
        %v635 = vunpack.c.l.b16 %v609
        %v636 = vpack.c.b16 %v633, %v632
        %v637 = vpack.c.b16 %v635, %v634
        %vm640 = vcmask 261120
        %v642 = vsel %vm640, %v627, 0
        %644 = vmatprep.subr.bf16.mxu0 0
        %645 = vmatpush1.bf16.msra.mxu0 %v636
        %646 = vmatprep.subr.bf16.mxu0 0
        %647 = vmatpush1.bf16.msra.mxu0 %v637
        %648 = vmatprep.subr.bf16.mxu0 0
        %649 = vmatpush1.bf16.msra.mxu0 0
        %650 = vmatprep.subr.bf16.mxu0 0
        %651 = vmatpush1.bf16.msra.mxu0 0
        %652 = vmatprep.subr.bf16.mxu0 0
        %653 = vmatpush1.bf16.msra.mxu0 0
        %654 = vmatprep.subr.bf16.mxu0 0
        %655 = vmatpush1.bf16.msra.mxu0 0
        %656 = vmatprep.subr.bf16.mxu0 0
        %657 = vmatpush1.bf16.msra.mxu0 0
        %658 = vmatprep.subr.bf16.mxu0 0
        %659 = vmatpush1.bf16.msra.mxu0 0
        %660 = vmatprep.subr.bf16.mxu0 0
        %661 = vmatpush1.bf16.msra.mxu0 0
        %662 = vmatprep.subr.bf16.mxu0 0
        %663 = vmatpush1.bf16.msra.mxu0 0
        %664 = vmatprep.subr.bf16.mxu0 0
        %665 = vmatpush1.bf16.msra.mxu0 0
        %666 = vmatprep.subr.bf16.mxu0 0
        %667 = vmatpush1.bf16.msra.mxu0 0
        %668 = vmatprep.subr.bf16.mxu0 0
        %669 = vmatpush1.bf16.msra.mxu0 0
        %670 = vmatprep.subr.bf16.mxu0 0
        %671 = vmatpush1.bf16.msra.mxu0 0
        %672 = vmatprep.subr.bf16.mxu0 0
        %673 = vmatpush1.bf16.msra.mxu0 0
        %674 = vmatprep.subr.bf16.mxu0 0
        %675 = vmatpush1.bf16.msra.mxu0 0
        %676 = vmatprep.mubr.bf16.mxu0 0
        %677 = vmatmul.mubr.bf16.gmra.mrb[0].mxu0 %v642
        %v678 = vpop.f32.mrb[0].mxu0
        %v679 = vadd.f32 %v621, %v678
        %v680 = vpop.f32.mrb[0].mxu0
        %v681 = vpop.f32.mrb[0].mxu0
        %v682 = vadd.f32 %v621, %v681
        %v683 = vpop.f32.mrb[0].mxu0
        %684 = vdwg.mxu0
        %v689 = vunpack.c.l.b16 %v610
        %v690 = vunpack.c.l.b16 %v611
        %v691 = vunpack.c.l.b16 %v612
        %v692 = vunpack.c.l.b16 %v613
        %v693 = vpack.c.b16 %v690, %v689
        %v694 = vpack.c.b16 %v692, %v691
        %v698 = vsel %vm640, 0, 0
        %700 = vmatprep.subr.bf16.mxu0 0
        %701 = vmatpush1.bf16.msra.mxu0 %v693
        %702 = vmatprep.subr.bf16.mxu0 0
        %703 = vmatpush1.bf16.msra.mxu0 %v694
        %704 = vmatprep.subr.bf16.mxu0 0
        %705 = vmatpush1.bf16.msra.mxu0 0
        %706 = vmatprep.subr.bf16.mxu0 0
        %707 = vmatpush1.bf16.msra.mxu0 0
        %708 = vmatprep.subr.bf16.mxu0 0
        %709 = vmatpush1.bf16.msra.mxu0 0
        %710 = vmatprep.subr.bf16.mxu0 0
        %711 = vmatpush1.bf16.msra.mxu0 0
        %712 = vmatprep.subr.bf16.mxu0 0
        %713 = vmatpush1.bf16.msra.mxu0 0
        %714 = vmatprep.subr.bf16.mxu0 0
        %715 = vmatpush1.bf16.msra.mxu0 0
        %716 = vmatprep.subr.bf16.mxu0 0
        %717 = vmatpush1.bf16.msra.mxu0 0
        %718 = vmatprep.subr.bf16.mxu0 0
        %719 = vmatpush1.bf16.msra.mxu0 0
        %720 = vmatprep.subr.bf16.mxu0 0
        %721 = vmatpush1.bf16.msra.mxu0 0
        %722 = vmatprep.subr.bf16.mxu0 0
        %723 = vmatpush1.bf16.msra.mxu0 0
        %724 = vmatprep.subr.bf16.mxu0 0
        %725 = vmatpush1.bf16.msra.mxu0 0
        %726 = vmatprep.subr.bf16.mxu0 0
        %727 = vmatpush1.bf16.msra.mxu0 0
        %728 = vmatprep.subr.bf16.mxu0 0
        %729 = vmatpush1.bf16.msra.mxu0 0
        %730 = vmatprep.subr.bf16.mxu0 0
        %731 = vmatpush1.bf16.msra.mxu0 0
        %732 = vmatprep.mubr.bf16.mxu0 0
        %733 = vmatmul.mubr.bf16.gmra.mrb[0].mxu0 %v698
        %v734 = vpop.f32.mrb[0].mxu0
        %v735 = vadd.f32 0.0, %v734
        %v736 = vpop.f32.mrb[0].mxu0
        %v737 = vpop.f32.mrb[0].mxu0
        %v738 = vadd.f32 0.0, %v737
        %v739 = vpop.f32.mrb[0].mxu0
        %740 = vdwg.mxu0
        %v741 = vadd.f32 %v679, %v735
        %v742 = vadd.f32 %v682, %v738
        %v743 = vxor.u32 %v741, 2147483648
        %v744 = vxor.u32 %v742, 2147483648
        %v745 = vmul.f32 %v743, 1.442695
        %v746 = vpow.pop %v745
        %v747 = vmul.f32 %v744, 1.442695
        %v748 = vpow.pop %v747
        %v749 = vadd.f32 %v746, 1.0
        %v750 = vadd.f32 %v748, 1.0
        %v751 = vrcp.pop %v749
        %v752 = vmul.f32 1.0, %v751
        %v753 = vrcp.pop %v750
        %v754 = vmul.f32 1.0, %v753
        %v755 = vtanh.pop %v741
        %v756 = vtanh.pop %v742
        %v757 = vmul.f32 %v752, 0.0
        %v758 = vmul.f32 %v754, 0.0
        %761 = vrot.lane.b32.xlu0 %v755, 32
        %v762 = vpop.permute.xlu0 %761
        %763 = vrot.lane.b32.xlu0 %v756, 32
        %v764 = vpop.permute.xlu0 %763
        %v767 = vmul.f32 %v752, %v762
        %v768 = vmul.f32 %v754, %v764
        %771 = vrot.lane.b32.xlu0 %v767, 32
        %v772 = vpop.permute.xlu0 %771
        %773 = vrot.lane.b32.xlu0 %v768, 32
        %v774 = vpop.permute.xlu0 %773
        %v777 = vadd.f32 %v757, %v772
        %v778 = vadd.f32 %v758, %v774
        %v779 = vtanh.pop %v777
        %v780 = vtanh.pop %v778
        %783 = vrot.lane.b32.xlu0 %v779, 32
        %v784 = vpop.permute.xlu0 %783
        %785 = vrot.lane.b32.xlu0 %v780, 32
        %v786 = vpop.permute.xlu0 %785
        %v789 = vmul.f32 %v752, %v784
        %v790 = vmul.f32 %v754, %v786
        %s791 = scalar_lea.vmem %s566, 8
        %v792 = vld [vmem:[%s791] sm:$0xf]
        %v793 = vld [vmem:[%s791 + $0x4] sm:$0xf]
        %v796 = vunpack.c.l.b16 %v792
        %v797 = vunpack.c.l.b16 %v793
        %v798 = vpack.c.b16 %v797, %v796
        %v800 = vsel %vm640, %v798, 0
        %802 = vmatprep.subr.bf16.mxu0 0
        %803 = vmatpush1.bf16.msra.mxu0 %v636
        %804 = vmatprep.subr.bf16.mxu0 0
        %805 = vmatpush1.bf16.msra.mxu0 %v637
        %806 = vmatprep.subr.bf16.mxu0 0
        %807 = vmatpush1.bf16.msra.mxu0 0
        %808 = vmatprep.subr.bf16.mxu0 0
        %809 = vmatpush1.bf16.msra.mxu0 0
        %810 = vmatprep.subr.bf16.mxu0 0
        %811 = vmatpush1.bf16.msra.mxu0 0
        %812 = vmatprep.subr.bf16.mxu0 0
        %813 = vmatpush1.bf16.msra.mxu0 0
        %814 = vmatprep.subr.bf16.mxu0 0
        %815 = vmatpush1.bf16.msra.mxu0 0
        %816 = vmatprep.subr.bf16.mxu0 0
        %817 = vmatpush1.bf16.msra.mxu0 0
        %818 = vmatprep.subr.bf16.mxu0 0
        %819 = vmatpush1.bf16.msra.mxu0 0
        %820 = vmatprep.subr.bf16.mxu0 0
        %821 = vmatpush1.bf16.msra.mxu0 0
        %822 = vmatprep.subr.bf16.mxu0 0
        %823 = vmatpush1.bf16.msra.mxu0 0
        %824 = vmatprep.subr.bf16.mxu0 0
        %825 = vmatpush1.bf16.msra.mxu0 0
        %826 = vmatprep.subr.bf16.mxu0 0
        %827 = vmatpush1.bf16.msra.mxu0 0
        %828 = vmatprep.subr.bf16.mxu0 0
        %829 = vmatpush1.bf16.msra.mxu0 0
        %830 = vmatprep.subr.bf16.mxu0 0
        %831 = vmatpush1.bf16.msra.mxu0 0
        %832 = vmatprep.subr.bf16.mxu0 0
        %833 = vmatpush1.bf16.msra.mxu0 0
        %834 = vmatprep.mubr.bf16.mxu0 0
        %835 = vmatmul.mubr.bf16.gmra.mrb[0].mxu0 %v800
        %v836 = vpop.f32.mrb[0].mxu0
        %v837 = vadd.f32 %v621, %v836
        %v838 = vpop.f32.mrb[0].mxu0
        %v839 = vpop.f32.mrb[0].mxu0
        %v840 = vadd.f32 %v621, %v839
        %v841 = vpop.f32.mrb[0].mxu0
        %842 = vdwg.mxu0
        %v843 = vpack.c.bf16 %v790, %v789
        %845 = vrot.lane.b32.xlu0 %v843, 64
        %v846 = vpop.permute.xlu0 %845
        %v848 = vsel %vm640, %v846, 0
        %850 = vmatprep.subr.bf16.mxu0 0
        %851 = vmatpush1.bf16.msra.mxu0 %v693
        %852 = vmatprep.subr.bf16.mxu0 0
        %853 = vmatpush1.bf16.msra.mxu0 %v694
        %854 = vmatprep.subr.bf16.mxu0 0
        %855 = vmatpush1.bf16.msra.mxu0 0
        %856 = vmatprep.subr.bf16.mxu0 0
        %857 = vmatpush1.bf16.msra.mxu0 0
        %858 = vmatprep.subr.bf16.mxu0 0
        %859 = vmatpush1.bf16.msra.mxu0 0
        %860 = vmatprep.subr.bf16.mxu0 0
        %861 = vmatpush1.bf16.msra.mxu0 0
        %862 = vmatprep.subr.bf16.mxu0 0
        %863 = vmatpush1.bf16.msra.mxu0 0
        %864 = vmatprep.subr.bf16.mxu0 0
        %865 = vmatpush1.bf16.msra.mxu0 0
        %866 = vmatprep.subr.bf16.mxu0 0
        %867 = vmatpush1.bf16.msra.mxu0 0
        %868 = vmatprep.subr.bf16.mxu0 0
        %869 = vmatpush1.bf16.msra.mxu0 0
        %870 = vmatprep.subr.bf16.mxu0 0
        %871 = vmatpush1.bf16.msra.mxu0 0
        %872 = vmatprep.subr.bf16.mxu0 0
        %873 = vmatpush1.bf16.msra.mxu0 0
        %874 = vmatprep.subr.bf16.mxu0 0
        %875 = vmatpush1.bf16.msra.mxu0 0
        %876 = vmatprep.subr.bf16.mxu0 0
        %877 = vmatpush1.bf16.msra.mxu0 0
        %878 = vmatprep.subr.bf16.mxu0 0
        %879 = vmatpush1.bf16.msra.mxu0 0
        %880 = vmatprep.subr.bf16.mxu0 0
        %881 = vmatpush1.bf16.msra.mxu0 0
        %882 = vmatprep.mubr.bf16.mxu0 0
        %883 = vmatmul.mubr.bf16.gmra.mrb[0].mxu0 %v848
        %v884 = vpop.f32.mrb[0].mxu0
        %v885 = vadd.f32 0.0, %v884
        %v886 = vpop.f32.mrb[0].mxu0
        %v887 = vpop.f32.mrb[0].mxu0
        %v888 = vadd.f32 0.0, %v887
        %v889 = vpop.f32.mrb[0].mxu0
        %890 = vdwg.mxu0
        %v891 = vadd.f32 %v837, %v885
        %v892 = vadd.f32 %v840, %v888
        %v893 = vxor.u32 %v891, 2147483648
        %v894 = vxor.u32 %v892, 2147483648
        %v895 = vmul.f32 %v893, 1.442695
        %v896 = vpow.pop %v895
        %v897 = vmul.f32 %v894, 1.442695
        %v898 = vpow.pop %v897
        %v899 = vadd.f32 %v896, 1.0
        %v900 = vadd.f32 %v898, 1.0
        %v901 = vrcp.pop %v899
        %v902 = vmul.f32 1.0, %v901
        %v903 = vrcp.pop %v900
        %v904 = vmul.f32 1.0, %v903
        %v905 = vtanh.pop %v891
        %v906 = vtanh.pop %v892
        %v907 = vmul.f32 %v902, %v777
        %v908 = vmul.f32 %v904, %v778
        %911 = vrot.lane.b32.xlu0 %v905, 32
        %v912 = vpop.permute.xlu0 %911
        %913 = vrot.lane.b32.xlu0 %v906, 32
        %v914 = vpop.permute.xlu0 %913
        %v917 = vmul.f32 %v902, %v912
        %v918 = vmul.f32 %v904, %v914
        %921 = vrot.lane.b32.xlu0 %v917, 32
        %v922 = vpop.permute.xlu0 %921
        %923 = vrot.lane.b32.xlu0 %v918, 32
        %v924 = vpop.permute.xlu0 %923
        %v927 = vadd.f32 %v907, %v922
        %v928 = vadd.f32 %v908, %v924
        %v929 = vtanh.pop %v927
        %v930 = vtanh.pop %v928
        %933 = vrot.lane.b32.xlu0 %v929, 32
        %v934 = vpop.permute.xlu0 %933
        %935 = vrot.lane.b32.xlu0 %v930, 32
        %v936 = vpop.permute.xlu0 %935
        %v939 = vmul.f32 %v902, %v934
        %v940 = vmul.f32 %v904, %v936
        %s941 = scalar_lea.vmem %s566, 16
        %v942 = vld [vmem:[%s941] sm:$0xf]
        %v943 = vld [vmem:[%s941 + $0x4] sm:$0xf]
        %v946 = vunpack.c.l.b16 %v942
        %v947 = vunpack.c.l.b16 %v943
        %v948 = vpack.c.b16 %v947, %v946
        %v950 = vsel %vm640, %v948, 0
        %952 = vmatprep.subr.bf16.mxu0 0
        %953 = vmatpush1.bf16.msra.mxu0 %v636
        %954 = vmatprep.subr.bf16.mxu0 0
        %955 = vmatpush1.bf16.msra.mxu0 %v637
        %956 = vmatprep.subr.bf16.mxu0 0
        %957 = vmatpush1.bf16.msra.mxu0 0
        %958 = vmatprep.subr.bf16.mxu0 0
        %959 = vmatpush1.bf16.msra.mxu0 0
        %960 = vmatprep.subr.bf16.mxu0 0
        %961 = vmatpush1.bf16.msra.mxu0 0
        %962 = vmatprep.subr.bf16.mxu0 0
        %963 = vmatpush1.bf16.msra.mxu0 0
        %964 = vmatprep.subr.bf16.mxu0 0
        %965 = vmatpush1.bf16.msra.mxu0 0
        %966 = vmatprep.subr.bf16.mxu0 0
        %967 = vmatpush1.bf16.msra.mxu0 0
        %968 = vmatprep.subr.bf16.mxu0 0
        %969 = vmatpush1.bf16.msra.mxu0 0
        %970 = vmatprep.subr.bf16.mxu0 0
        %971 = vmatpush1.bf16.msra.mxu0 0
        %972 = vmatprep.subr.bf16.mxu0 0
        %973 = vmatpush1.bf16.msra.mxu0 0
        %974 = vmatprep.subr.bf16.mxu0 0
        %975 = vmatpush1.bf16.msra.mxu0 0
        %976 = vmatprep.subr.bf16.mxu0 0
        %977 = vmatpush1.bf16.msra.mxu0 0
        %978 = vmatprep.subr.bf16.mxu0 0
        %979 = vmatpush1.bf16.msra.mxu0 0
        %980 = vmatprep.subr.bf16.mxu0 0
        %981 = vmatpush1.bf16.msra.mxu0 0
        %982 = vmatprep.subr.bf16.mxu0 0
        %983 = vmatpush1.bf16.msra.mxu0 0
        %984 = vmatprep.mubr.bf16.mxu0 0
        %985 = vmatmul.mubr.bf16.gmra.mrb[0].mxu0 %v950
        %v986 = vpop.f32.mrb[0].mxu0
        %v987 = vadd.f32 %v621, %v986
        %v988 = vpop.f32.mrb[0].mxu0
        %v989 = vpop.f32.mrb[0].mxu0
        %v990 = vadd.f32 %v621, %v989
        %v991 = vpop.f32.mrb[0].mxu0
        %992 = vdwg.mxu0
        %v993 = vpack.c.bf16 %v940, %v939
        %995 = vrot.lane.b32.xlu0 %v993, 64
        %v996 = vpop.permute.xlu0 %995
        %v998 = vsel %vm640, %v996, 0
        %1000 = vmatprep.subr.bf16.mxu0 0
        %1001 = vmatpush1.bf16.msra.mxu0 %v693
        %1002 = vmatprep.subr.bf16.mxu0 0
        %1003 = vmatpush1.bf16.msra.mxu0 %v694
        %1004 = vmatprep.subr.bf16.mxu0 0
        %1005 = vmatpush1.bf16.msra.mxu0 0
        %1006 = vmatprep.subr.bf16.mxu0 0
        %1007 = vmatpush1.bf16.msra.mxu0 0
        %1008 = vmatprep.subr.bf16.mxu0 0
        %1009 = vmatpush1.bf16.msra.mxu0 0
        %1010 = vmatprep.subr.bf16.mxu0 0
        %1011 = vmatpush1.bf16.msra.mxu0 0
        %1012 = vmatprep.subr.bf16.mxu0 0
        %1013 = vmatpush1.bf16.msra.mxu0 0
        %1014 = vmatprep.subr.bf16.mxu0 0
        %1015 = vmatpush1.bf16.msra.mxu0 0
        %1016 = vmatprep.subr.bf16.mxu0 0
        %1017 = vmatpush1.bf16.msra.mxu0 0
        %1018 = vmatprep.subr.bf16.mxu0 0
        %1019 = vmatpush1.bf16.msra.mxu0 0
        %1020 = vmatprep.subr.bf16.mxu0 0
        %1021 = vmatpush1.bf16.msra.mxu0 0
        %1022 = vmatprep.subr.bf16.mxu0 0
        %1023 = vmatpush1.bf16.msra.mxu0 0
        %1024 = vmatprep.subr.bf16.mxu0 0
        %1025 = vmatpush1.bf16.msra.mxu0 0
        %1026 = vmatprep.subr.bf16.mxu0 0
        %1027 = vmatpush1.bf16.msra.mxu0 0
        %1028 = vmatprep.subr.bf16.mxu0 0
        %1029 = vmatpush1.bf16.msra.mxu0 0
        %1030 = vmatprep.subr.bf16.mxu0 0
        %1031 = vmatpush1.bf16.msra.mxu0 0
        %1032 = vmatprep.mubr.bf16.mxu0 0
        %1033 = vmatmul.mubr.bf16.gmra.mrb[0].mxu0 %v998
        %v1034 = vpop.f32.mrb[0].mxu0
        %v1035 = vadd.f32 0.0, %v1034
        %v1036 = vpop.f32.mrb[0].mxu0
        %v1037 = vpop.f32.mrb[0].mxu0
        %v1038 = vadd.f32 0.0, %v1037
        %v1039 = vpop.f32.mrb[0].mxu0
        %1040 = vdwg.mxu0
        %v1041 = vadd.f32 %v987, %v1035
        %v1042 = vadd.f32 %v990, %v1038
        %v1043 = vxor.u32 %v1041, 2147483648
        %v1044 = vxor.u32 %v1042, 2147483648
        %v1045 = vmul.f32 %v1043, 1.442695
        %v1046 = vpow.pop %v1045
        %v1047 = vmul.f32 %v1044, 1.442695
        %v1048 = vpow.pop %v1047
        %v1049 = vadd.f32 %v1046, 1.0
        %v1050 = vadd.f32 %v1048, 1.0
        %v1051 = vrcp.pop %v1049
        %v1052 = vmul.f32 1.0, %v1051
        %v1053 = vrcp.pop %v1050
        %v1054 = vmul.f32 1.0, %v1053
        %v1055 = vtanh.pop %v1041
        %v1056 = vtanh.pop %v1042
        %v1057 = vmul.f32 %v1052, %v927
        %v1058 = vmul.f32 %v1054, %v928
        %1061 = vrot.lane.b32.xlu0 %v1055, 32
        %v1062 = vpop.permute.xlu0 %1061
        %1063 = vrot.lane.b32.xlu0 %v1056, 32
        %v1064 = vpop.permute.xlu0 %1063
        %v1067 = vmul.f32 %v1052, %v1062
        %v1068 = vmul.f32 %v1054, %v1064
        %1071 = vrot.lane.b32.xlu0 %v1067, 32
        %v1072 = vpop.permute.xlu0 %1071
        %1073 = vrot.lane.b32.xlu0 %v1068, 32
        %v1074 = vpop.permute.xlu0 %1073
        %v1077 = vadd.f32 %v1057, %v1072
        %v1078 = vadd.f32 %v1058, %v1074
        %v1079 = vtanh.pop %v1077
        %v1080 = vtanh.pop %v1078
        %1083 = vrot.lane.b32.xlu0 %v1079, 32
        %v1084 = vpop.permute.xlu0 %1083
        %1085 = vrot.lane.b32.xlu0 %v1080, 32
        %v1086 = vpop.permute.xlu0 %1085
        %v1089 = vmul.f32 %v1052, %v1084
        %v1090 = vmul.f32 %v1054, %v1086
        %s1091 = scalar_lea.vmem %s566, 24
        %v1092 = vld [vmem:[%s1091] sm:$0xf]
        %v1093 = vld [vmem:[%s1091 + $0x4] sm:$0xf]
        %v1096 = vunpack.c.l.b16 %v1092
        %v1097 = vunpack.c.l.b16 %v1093
        %v1098 = vpack.c.b16 %v1097, %v1096
        %v1100 = vsel %vm640, %v1098, 0
        %1102 = vmatprep.subr.bf16.mxu0 0
        %1103 = vmatpush1.bf16.msra.mxu0 %v636
        %1104 = vmatprep.subr.bf16.mxu0 0
        %1105 = vmatpush1.bf16.msra.mxu0 %v637
        %1106 = vmatprep.subr.bf16.mxu0 0
        %1107 = vmatpush1.bf16.msra.mxu0 0
        %1108 = vmatprep.subr.bf16.mxu0 0
        %1109 = vmatpush1.bf16.msra.mxu0 0
        %1110 = vmatprep.subr.bf16.mxu0 0
        %1111 = vmatpush1.bf16.msra.mxu0 0
        %1112 = vmatprep.subr.bf16.mxu0 0
        %1113 = vmatpush1.bf16.msra.mxu0 0
        %1114 = vmatprep.subr.bf16.mxu0 0
        %1115 = vmatpush1.bf16.msra.mxu0 0
        %1116 = vmatprep.subr.bf16.mxu0 0
        %1117 = vmatpush1.bf16.msra.mxu0 0
        %1118 = vmatprep.subr.bf16.mxu0 0
        %1119 = vmatpush1.bf16.msra.mxu0 0
        %1120 = vmatprep.subr.bf16.mxu0 0
        %1121 = vmatpush1.bf16.msra.mxu0 0
        %1122 = vmatprep.subr.bf16.mxu0 0
        %1123 = vmatpush1.bf16.msra.mxu0 0
        %1124 = vmatprep.subr.bf16.mxu0 0
        %1125 = vmatpush1.bf16.msra.mxu0 0
        %1126 = vmatprep.subr.bf16.mxu0 0
        %1127 = vmatpush1.bf16.msra.mxu0 0
        %1128 = vmatprep.subr.bf16.mxu0 0
        %1129 = vmatpush1.bf16.msra.mxu0 0
        %1130 = vmatprep.subr.bf16.mxu0 0
        %1131 = vmatpush1.bf16.msra.mxu0 0
        %1132 = vmatprep.subr.bf16.mxu0 0
        %1133 = vmatpush1.bf16.msra.mxu0 0
        %1134 = vmatprep.mubr.bf16.mxu0 0
        %1135 = vmatmul.mubr.bf16.gmra.mrb[0].mxu0 %v1100
        %v1136 = vpop.f32.mrb[0].mxu0
        %v1137 = vadd.f32 %v621, %v1136
        %v1138 = vpop.f32.mrb[0].mxu0
        %v1139 = vpop.f32.mrb[0].mxu0
        %v1140 = vadd.f32 %v621, %v1139
        %v1141 = vpop.f32.mrb[0].mxu0
        %1142 = vdwg.mxu0
        %v1143 = vpack.c.bf16 %v1090, %v1089
        %1145 = vrot.lane.b32.xlu0 %v1143, 64
        %v1146 = vpop.permute.xlu0 %1145
        %v1148 = vsel %vm640, %v1146, 0
        %1150 = vmatprep.subr.bf16.mxu0 0
        %1151 = vmatpush1.bf16.msra.mxu0 %v693
        %1152 = vmatprep.subr.bf16.mxu0 0
        %1153 = vmatpush1.bf16.msra.mxu0 %v694
        %1154 = vmatprep.subr.bf16.mxu0 0
        %1155 = vmatpush1.bf16.msra.mxu0 0
        %1156 = vmatprep.subr.bf16.mxu0 0
        %1157 = vmatpush1.bf16.msra.mxu0 0
        %1158 = vmatprep.subr.bf16.mxu0 0
        %1159 = vmatpush1.bf16.msra.mxu0 0
        %1160 = vmatprep.subr.bf16.mxu0 0
        %1161 = vmatpush1.bf16.msra.mxu0 0
        %1162 = vmatprep.subr.bf16.mxu0 0
        %1163 = vmatpush1.bf16.msra.mxu0 0
        %1164 = vmatprep.subr.bf16.mxu0 0
        %1165 = vmatpush1.bf16.msra.mxu0 0
        %1166 = vmatprep.subr.bf16.mxu0 0
        %1167 = vmatpush1.bf16.msra.mxu0 0
        %1168 = vmatprep.subr.bf16.mxu0 0
        %1169 = vmatpush1.bf16.msra.mxu0 0
        %1170 = vmatprep.subr.bf16.mxu0 0
        %1171 = vmatpush1.bf16.msra.mxu0 0
        %1172 = vmatprep.subr.bf16.mxu0 0
        %1173 = vmatpush1.bf16.msra.mxu0 0
        %1174 = vmatprep.subr.bf16.mxu0 0
        %1175 = vmatpush1.bf16.msra.mxu0 0
        %1176 = vmatprep.subr.bf16.mxu0 0
        %1177 = vmatpush1.bf16.msra.mxu0 0
        %1178 = vmatprep.subr.bf16.mxu0 0
        %1179 = vmatpush1.bf16.msra.mxu0 0
        %1180 = vmatprep.subr.bf16.mxu0 0
        %1181 = vmatpush1.bf16.msra.mxu0 0
        %1182 = vmatprep.mubr.bf16.mxu0 0
        %1183 = vmatmul.mubr.bf16.gmra.mrb[0].mxu0 %v1148
        %v1184 = vpop.f32.mrb[0].mxu0
        %v1185 = vadd.f32 0.0, %v1184
        %v1186 = vpop.f32.mrb[0].mxu0
        %v1187 = vpop.f32.mrb[0].mxu0
        %v1188 = vadd.f32 0.0, %v1187
        %v1189 = vpop.f32.mrb[0].mxu0
        %1190 = vdwg.mxu0
        %v1191 = vadd.f32 %v1137, %v1185
        %v1192 = vadd.f32 %v1140, %v1188
        %v1193 = vxor.u32 %v1191, 2147483648
        %v1194 = vxor.u32 %v1192, 2147483648
        %v1195 = vmul.f32 %v1193, 1.442695
        %v1196 = vpow.pop %v1195
        %v1197 = vmul.f32 %v1194, 1.442695
        %v1198 = vpow.pop %v1197
        %v1199 = vadd.f32 %v1196, 1.0
        %v1200 = vadd.f32 %v1198, 1.0
        %v1201 = vrcp.pop %v1199
        %v1202 = vmul.f32 1.0, %v1201
        %v1203 = vrcp.pop %v1200
        %v1204 = vmul.f32 1.0, %v1203
        %v1205 = vtanh.pop %v1191
        %v1206 = vtanh.pop %v1192
        %v1207 = vmul.f32 %v1202, %v1077
        %v1208 = vmul.f32 %v1204, %v1078
        %1211 = vrot.lane.b32.xlu0 %v1205, 32
        %v1212 = vpop.permute.xlu0 %1211
        %1213 = vrot.lane.b32.xlu0 %v1206, 32
        %v1214 = vpop.permute.xlu0 %1213
        %v1217 = vmul.f32 %v1202, %v1212
        %v1218 = vmul.f32 %v1204, %v1214
        %1221 = vrot.lane.b32.xlu0 %v1217, 32
        %v1222 = vpop.permute.xlu0 %1221
        %1223 = vrot.lane.b32.xlu0 %v1218, 32
        %v1224 = vpop.permute.xlu0 %1223
        %v1227 = vadd.f32 %v1207, %v1222
        %v1228 = vadd.f32 %v1208, %v1224
        %v1229 = vtanh.pop %v1227
        %v1230 = vtanh.pop %v1228
        %1233 = vrot.lane.b32.xlu0 %v1229, 32
        %v1234 = vpop.permute.xlu0 %1233
        %1235 = vrot.lane.b32.xlu0 %v1230, 32
        %v1236 = vpop.permute.xlu0 %1235
        %v1239 = vmul.f32 %v1202, %v1234
        %v1240 = vmul.f32 %v1204, %v1236
        %s1241 = scalar_lea.vmem %s566, 32
        %v1242 = vld [vmem:[%s1241] sm:$0xf]
        %v1243 = vld [vmem:[%s1241 + $0x4] sm:$0xf]
        %v1246 = vunpack.c.l.b16 %v1242
        %v1247 = vunpack.c.l.b16 %v1243
        %v1248 = vpack.c.b16 %v1247, %v1246
        %v1250 = vsel %vm640, %v1248, 0
        %1252 = vmatprep.subr.bf16.mxu0 0
        %1253 = vmatpush1.bf16.msra.mxu0 %v636
        %1254 = vmatprep.subr.bf16.mxu0 0
        %1255 = vmatpush1.bf16.msra.mxu0 %v637
        %1256 = vmatprep.subr.bf16.mxu0 0
        %1257 = vmatpush1.bf16.msra.mxu0 0
        %1258 = vmatprep.subr.bf16.mxu0 0
        %1259 = vmatpush1.bf16.msra.mxu0 0
        %1260 = vmatprep.subr.bf16.mxu0 0
        %1261 = vmatpush1.bf16.msra.mxu0 0
        %1262 = vmatprep.subr.bf16.mxu0 0
        %1263 = vmatpush1.bf16.msra.mxu0 0
        %1264 = vmatprep.subr.bf16.mxu0 0
        %1265 = vmatpush1.bf16.msra.mxu0 0
        %1266 = vmatprep.subr.bf16.mxu0 0
        %1267 = vmatpush1.bf16.msra.mxu0 0
        %1268 = vmatprep.subr.bf16.mxu0 0
        %1269 = vmatpush1.bf16.msra.mxu0 0
        %1270 = vmatprep.subr.bf16.mxu0 0
        %1271 = vmatpush1.bf16.msra.mxu0 0
        %1272 = vmatprep.subr.bf16.mxu0 0
        %1273 = vmatpush1.bf16.msra.mxu0 0
        %1274 = vmatprep.subr.bf16.mxu0 0
        %1275 = vmatpush1.bf16.msra.mxu0 0
        %1276 = vmatprep.subr.bf16.mxu0 0
        %1277 = vmatpush1.bf16.msra.mxu0 0
        %1278 = vmatprep.subr.bf16.mxu0 0
        %1279 = vmatpush1.bf16.msra.mxu0 0
        %1280 = vmatprep.subr.bf16.mxu0 0
        %1281 = vmatpush1.bf16.msra.mxu0 0
        %1282 = vmatprep.subr.bf16.mxu0 0
        %1283 = vmatpush1.bf16.msra.mxu0 0
        %1284 = vmatprep.mubr.bf16.mxu0 0
        %1285 = vmatmul.mubr.bf16.gmra.mrb[0].mxu0 %v1250
        %v1286 = vpop.f32.mrb[0].mxu0
        %v1287 = vadd.f32 %v621, %v1286
        %v1288 = vpop.f32.mrb[0].mxu0
        %v1289 = vpop.f32.mrb[0].mxu0
        %v1290 = vadd.f32 %v621, %v1289
        %v1291 = vpop.f32.mrb[0].mxu0
        %1292 = vdwg.mxu0
        %v1293 = vpack.c.bf16 %v1240, %v1239
        %1295 = vrot.lane.b32.xlu0 %v1293, 64
        %v1296 = vpop.permute.xlu0 %1295
        %v1298 = vsel %vm640, %v1296, 0
        %1300 = vmatprep.subr.bf16.mxu0 0
        %1301 = vmatpush1.bf16.msra.mxu0 %v693
        %1302 = vmatprep.subr.bf16.mxu0 0
        %1303 = vmatpush1.bf16.msra.mxu0 %v694
        %1304 = vmatprep.subr.bf16.mxu0 0
        %1305 = vmatpush1.bf16.msra.mxu0 0
        %1306 = vmatprep.subr.bf16.mxu0 0
        %1307 = vmatpush1.bf16.msra.mxu0 0
        %1308 = vmatprep.subr.bf16.mxu0 0
        %1309 = vmatpush1.bf16.msra.mxu0 0
        %1310 = vmatprep.subr.bf16.mxu0 0
        %1311 = vmatpush1.bf16.msra.mxu0 0
        %1312 = vmatprep.subr.bf16.mxu0 0
        %1313 = vmatpush1.bf16.msra.mxu0 0
        %1314 = vmatprep.subr.bf16.mxu0 0
        %1315 = vmatpush1.bf16.msra.mxu0 0
        %1316 = vmatprep.subr.bf16.mxu0 0
        %1317 = vmatpush1.bf16.msra.mxu0 0
        %1318 = vmatprep.subr.bf16.mxu0 0
        %1319 = vmatpush1.bf16.msra.mxu0 0
        %1320 = vmatprep.subr.bf16.mxu0 0
        %1321 = vmatpush1.bf16.msra.mxu0 0
        %1322 = vmatprep.subr.bf16.mxu0 0
        %1323 = vmatpush1.bf16.msra.mxu0 0
        %1324 = vmatprep.subr.bf16.mxu0 0
        %1325 = vmatpush1.bf16.msra.mxu0 0
        %1326 = vmatprep.subr.bf16.mxu0 0
        %1327 = vmatpush1.bf16.msra.mxu0 0
        %1328 = vmatprep.subr.bf16.mxu0 0
        %1329 = vmatpush1.bf16.msra.mxu0 0
        %1330 = vmatprep.subr.bf16.mxu0 0
        %1331 = vmatpush1.bf16.msra.mxu0 0
        %1332 = vmatprep.mubr.bf16.mxu0 0
        %1333 = vmatmul.mubr.bf16.gmra.mrb[0].mxu0 %v1298
        %v1334 = vpop.f32.mrb[0].mxu0
        %v1335 = vadd.f32 0.0, %v1334
        %v1336 = vpop.f32.mrb[0].mxu0
        %v1337 = vpop.f32.mrb[0].mxu0
        %v1338 = vadd.f32 0.0, %v1337
        %v1339 = vpop.f32.mrb[0].mxu0
        %1340 = vdwg.mxu0
        %v1341 = vadd.f32 %v1287, %v1335
        %v1342 = vadd.f32 %v1290, %v1338
        %v1343 = vxor.u32 %v1341, 2147483648
        %v1344 = vxor.u32 %v1342, 2147483648
        %v1345 = vmul.f32 %v1343, 1.442695
        %v1346 = vpow.pop %v1345
        %v1347 = vmul.f32 %v1344, 1.442695
        %v1348 = vpow.pop %v1347
        %v1349 = vadd.f32 %v1346, 1.0
        %v1350 = vadd.f32 %v1348, 1.0
        %v1351 = vrcp.pop %v1349
        %v1352 = vmul.f32 1.0, %v1351
        %v1353 = vrcp.pop %v1350
        %v1354 = vmul.f32 1.0, %v1353
        %v1355 = vtanh.pop %v1341
        %v1356 = vtanh.pop %v1342
        %v1357 = vmul.f32 %v1352, %v1227
        %v1358 = vmul.f32 %v1354, %v1228
        %1361 = vrot.lane.b32.xlu0 %v1355, 32
        %v1362 = vpop.permute.xlu0 %1361
        %1363 = vrot.lane.b32.xlu0 %v1356, 32
        %v1364 = vpop.permute.xlu0 %1363
        %v1367 = vmul.f32 %v1352, %v1362
        %v1368 = vmul.f32 %v1354, %v1364
        %1371 = vrot.lane.b32.xlu0 %v1367, 32
        %v1372 = vpop.permute.xlu0 %1371
        %1373 = vrot.lane.b32.xlu0 %v1368, 32
        %v1374 = vpop.permute.xlu0 %1373
        %v1377 = vadd.f32 %v1357, %v1372
        %v1378 = vadd.f32 %v1358, %v1374
        %v1379 = vtanh.pop %v1377
        %v1380 = vtanh.pop %v1378
        %1383 = vrot.lane.b32.xlu0 %v1379, 32
        %v1384 = vpop.permute.xlu0 %1383
        %1385 = vrot.lane.b32.xlu0 %v1380, 32
        %v1386 = vpop.permute.xlu0 %1385
        %v1389 = vmul.f32 %v1352, %v1384
        %v1390 = vmul.f32 %v1354, %v1386
        %s1391 = scalar_lea.vmem %s566, 40
        %v1392 = vld [vmem:[%s1391] sm:$0xf]
        %v1393 = vld [vmem:[%s1391 + $0x4] sm:$0xf]
        %v1396 = vunpack.c.l.b16 %v1392
        %v1397 = vunpack.c.l.b16 %v1393
        %v1398 = vpack.c.b16 %v1397, %v1396
        %v1400 = vsel %vm640, %v1398, 0
        %1402 = vmatprep.subr.bf16.mxu0 0
        %1403 = vmatpush1.bf16.msra.mxu0 %v636
        %1404 = vmatprep.subr.bf16.mxu0 0
        %1405 = vmatpush1.bf16.msra.mxu0 %v637
        %1406 = vmatprep.subr.bf16.mxu0 0
        %1407 = vmatpush1.bf16.msra.mxu0 0
        %1408 = vmatprep.subr.bf16.mxu0 0
        %1409 = vmatpush1.bf16.msra.mxu0 0
        %1410 = vmatprep.subr.bf16.mxu0 0
        %1411 = vmatpush1.bf16.msra.mxu0 0
        %1412 = vmatprep.subr.bf16.mxu0 0
        %1413 = vmatpush1.bf16.msra.mxu0 0
        %1414 = vmatprep.subr.bf16.mxu0 0
        %1415 = vmatpush1.bf16.msra.mxu0 0
        %1416 = vmatprep.subr.bf16.mxu0 0
        %1417 = vmatpush1.bf16.msra.mxu0 0
        %1418 = vmatprep.subr.bf16.mxu0 0
        %1419 = vmatpush1.bf16.msra.mxu0 0
        %1420 = vmatprep.subr.bf16.mxu0 0
        %1421 = vmatpush1.bf16.msra.mxu0 0
        %1422 = vmatprep.subr.bf16.mxu0 0
        %1423 = vmatpush1.bf16.msra.mxu0 0
        %1424 = vmatprep.subr.bf16.mxu0 0
        %1425 = vmatpush1.bf16.msra.mxu0 0
        %1426 = vmatprep.subr.bf16.mxu0 0
        %1427 = vmatpush1.bf16.msra.mxu0 0
        %1428 = vmatprep.subr.bf16.mxu0 0
        %1429 = vmatpush1.bf16.msra.mxu0 0
        %1430 = vmatprep.subr.bf16.mxu0 0
        %1431 = vmatpush1.bf16.msra.mxu0 0
        %1432 = vmatprep.subr.bf16.mxu0 0
        %1433 = vmatpush1.bf16.msra.mxu0 0
        %1434 = vmatprep.mubr.bf16.mxu0 0
        %1435 = vmatmul.mubr.bf16.gmra.mrb[0].mxu0 %v1400
        %v1436 = vpop.f32.mrb[0].mxu0
        %v1437 = vadd.f32 %v621, %v1436
        %v1438 = vpop.f32.mrb[0].mxu0
        %v1439 = vpop.f32.mrb[0].mxu0
        %v1440 = vadd.f32 %v621, %v1439
        %v1441 = vpop.f32.mrb[0].mxu0
        %1442 = vdwg.mxu0
        %v1443 = vpack.c.bf16 %v1390, %v1389
        %1445 = vrot.lane.b32.xlu0 %v1443, 64
        %v1446 = vpop.permute.xlu0 %1445
        %v1448 = vsel %vm640, %v1446, 0
        %1450 = vmatprep.subr.bf16.mxu0 0
        %1451 = vmatpush1.bf16.msra.mxu0 %v693
        %1452 = vmatprep.subr.bf16.mxu0 0
        %1453 = vmatpush1.bf16.msra.mxu0 %v694
        %1454 = vmatprep.subr.bf16.mxu0 0
        %1455 = vmatpush1.bf16.msra.mxu0 0
        %1456 = vmatprep.subr.bf16.mxu0 0
        %1457 = vmatpush1.bf16.msra.mxu0 0
        %1458 = vmatprep.subr.bf16.mxu0 0
        %1459 = vmatpush1.bf16.msra.mxu0 0
        %1460 = vmatprep.subr.bf16.mxu0 0
        %1461 = vmatpush1.bf16.msra.mxu0 0
        %1462 = vmatprep.subr.bf16.mxu0 0
        %1463 = vmatpush1.bf16.msra.mxu0 0
        %1464 = vmatprep.subr.bf16.mxu0 0
        %1465 = vmatpush1.bf16.msra.mxu0 0
        %1466 = vmatprep.subr.bf16.mxu0 0
        %1467 = vmatpush1.bf16.msra.mxu0 0
        %1468 = vmatprep.subr.bf16.mxu0 0
        %1469 = vmatpush1.bf16.msra.mxu0 0
        %1470 = vmatprep.subr.bf16.mxu0 0
        %1471 = vmatpush1.bf16.msra.mxu0 0
        %1472 = vmatprep.subr.bf16.mxu0 0
        %1473 = vmatpush1.bf16.msra.mxu0 0
        %1474 = vmatprep.subr.bf16.mxu0 0
        %1475 = vmatpush1.bf16.msra.mxu0 0
        %1476 = vmatprep.subr.bf16.mxu0 0
        %1477 = vmatpush1.bf16.msra.mxu0 0
        %1478 = vmatprep.subr.bf16.mxu0 0
        %1479 = vmatpush1.bf16.msra.mxu0 0
        %1480 = vmatprep.subr.bf16.mxu0 0
        %1481 = vmatpush1.bf16.msra.mxu0 0
        %1482 = vmatprep.mubr.bf16.mxu0 0
        %1483 = vmatmul.mubr.bf16.gmra.mrb[0].mxu0 %v1448
        %v1484 = vpop.f32.mrb[0].mxu0
        %v1485 = vadd.f32 0.0, %v1484
        %v1486 = vpop.f32.mrb[0].mxu0
        %v1487 = vpop.f32.mrb[0].mxu0
        %v1488 = vadd.f32 0.0, %v1487
        %v1489 = vpop.f32.mrb[0].mxu0
        %1490 = vdwg.mxu0
        %v1491 = vadd.f32 %v1437, %v1485
        %v1492 = vadd.f32 %v1440, %v1488
        %v1493 = vxor.u32 %v1491, 2147483648
        %v1494 = vxor.u32 %v1492, 2147483648
        %v1495 = vmul.f32 %v1493, 1.442695
        %v1496 = vpow.pop %v1495
        %v1497 = vmul.f32 %v1494, 1.442695
        %v1498 = vpow.pop %v1497
        %v1499 = vadd.f32 %v1496, 1.0
        %v1500 = vadd.f32 %v1498, 1.0
        %v1501 = vrcp.pop %v1499
        %v1502 = vmul.f32 1.0, %v1501
        %v1503 = vrcp.pop %v1500
        %v1504 = vmul.f32 1.0, %v1503
        %v1505 = vtanh.pop %v1491
        %v1506 = vtanh.pop %v1492
        %v1507 = vmul.f32 %v1502, %v1377
        %v1508 = vmul.f32 %v1504, %v1378
        %1511 = vrot.lane.b32.xlu0 %v1505, 32
        %v1512 = vpop.permute.xlu0 %1511
        %1513 = vrot.lane.b32.xlu0 %v1506, 32
        %v1514 = vpop.permute.xlu0 %1513
        %v1517 = vmul.f32 %v1502, %v1512
        %v1518 = vmul.f32 %v1504, %v1514
        %1521 = vrot.lane.b32.xlu0 %v1517, 32
        %v1522 = vpop.permute.xlu0 %1521
        %1523 = vrot.lane.b32.xlu0 %v1518, 32
        %v1524 = vpop.permute.xlu0 %1523
        %v1527 = vadd.f32 %v1507, %v1522
        %v1528 = vadd.f32 %v1508, %v1524
        %v1529 = vtanh.pop %v1527
        %v1530 = vtanh.pop %v1528
        %1533 = vrot.lane.b32.xlu0 %v1529, 32
        %v1534 = vpop.permute.xlu0 %1533
        %1535 = vrot.lane.b32.xlu0 %v1530, 32
        %v1536 = vpop.permute.xlu0 %1535
        %v1539 = vmul.f32 %v1502, %v1534
        %v1540 = vmul.f32 %v1504, %v1536
        %1543 = vrot.lane.b32.xlu0 %v1539, 64
        %v1544 = vpop.permute.xlu0 %1543
        %1545 = vrot.lane.b32.xlu0 %v1540, 64
        %v1546 = vpop.permute.xlu0 %1545
        %1549 = vst.msk [vmem:[#allocation2] sm:$0xff] %vm640, %v1544
        %1550 = vst.msk [vmem:[#allocation2 + $0x8] sm:$0xff] %vm640, %v1546
        %1553 = vrot.lane.b32.xlu0 %v1527, 96
        %v1554 = vpop.permute.xlu0 %1553
        %1555 = vrot.lane.b32.xlu0 %v1528, 96
        %v1556 = vpop.permute.xlu0 %1555
        %1559 = vst.msk [vmem:[#allocation3] sm:$0xff] %vm640, %v1554
        %1560 = vst.msk [vmem:[#allocation3 + $0x8] sm:$0xff] %vm640, %v1556
        %1561 = vst.msk [vmem:[#allocation4] sm:$0xff] %vm640, %v1544
        %1562 = vst.msk [vmem:[#allocation4 + $0x8] sm:$0xff] %vm640, %v1546
        %1563 = vst.msk [vmem:[#allocation5] sm:$0xff] %vm640, %v1554
        %1564 = vst.msk [vmem:[#allocation5 + $0x8] sm:$0xff] %vm640, %v1556
        %1565 = vst.msk [vmem:[#allocation6] sm:$0xff] %vm640, 0.0
        %1566 = vst.msk [vmem:[#allocation6 + $0x8] sm:$0xff] %vm640, 0.0
      $region80: #{encode_decode_arnet_forward.1} parent=75 // pred_fallthru
        _
      %v1567 = vld [vmem:[%s6] sm:$0xf]
      %v1568 = vld [vmem:[%s6 + $0x4] sm:$0xf]
      %v1569 = vld [vmem:[%s6 + $0x8] sm:$0xf]
      %v1570 = vld [vmem:[%s6 + $0xc] sm:$0xf]
      %v1571 = vld [vmem:[%s7] sm:$0xf]
      %v1572 = vld [vmem:[%s7 + $0x4] sm:$0xf]
      %v1573 = vld [vmem:[%s7 + $0x8] sm:$0xf]
      %v1574 = vld [vmem:[%s7 + $0xc] sm:$0xf]
      %v1575 = vld [vmem:[%s8] sm:$0x1]
      %v1576 = vld [vmem:[%s9] sm:$0xff]
      %v1577 = vld [vmem:[%s9 + $0x8] sm:$0xff]
      %v1578 = vld [vmem:[%s9 + $0x10] sm:$0xff]
      %v1579 = vld [vmem:[%s9 + $0x18] sm:$0xff]
      %v1580 = vld [vmem:[%s10] sm:$0x3]
      %v1581 = vld [vmem:[%s11] sm:$0xf]
      %v1582 = vld [vmem:[%s11 + $0x4] sm:$0xf]
      %v1583 = vld [vmem:[%s11 + $0x8] sm:$0xf]
      %v1584 = vld [vmem:[%s11 + $0xc] sm:$0xf]
      %v1585 = vld [vmem:[%s12] sm:$0xf]
      %v1586 = vld [vmem:[%s12 + $0x4] sm:$0xf]
      %v1587 = vld [vmem:[%s12 + $0x8] sm:$0xf]
      %v1588 = vld [vmem:[%s12 + $0xc] sm:$0xf]
      %v1589 = vld [vmem:[%s13] sm:$0x1]
      %v1590 = vld [vmem:[#allocation2] sm:$0xff]
      %v1591 = vld [vmem:[#allocation2 + $0x8] sm:$0xff]
      %v1592 = vld [vmem:[#allocation3] sm:$0xff]
      %v1593 = vld [vmem:[#allocation3 + $0x8] sm:$0xff]
      %v1594 = vld [vmem:[%s576] sm:$0xf]
      %v1595 = vld [vmem:[%s576 + $0x4] sm:$0xf]
      %v1597 = vlaneseq
      %v1598 = vshrl.u32 %v1597, 7
      %v1599 = vsub.s32 0, %v1598
      %v1600 = vrot.slane %v1575, %v1599
      %v1604 = vunpack.c.l.b16 %v1594
      %v1605 = vunpack.c.l.b16 %v1595
      %v1606 = vpack.c.b16 %v1605, %v1604
      %v1611 = vunpack.c.l.b16 %v1567
      %v1612 = vunpack.c.l.b16 %v1568
      %v1613 = vunpack.c.l.b16 %v1569
      %v1614 = vunpack.c.l.b16 %v1570
      %v1615 = vpack.c.b16 %v1612, %v1611
      %v1616 = vpack.c.b16 %v1614, %v1613
      %vm1619 = vcmask 261120
      %v1621 = vsel %vm1619, %v1606, 0
      %1623 = vmatprep.subr.bf16.mxu0 0
      %1624 = vmatpush1.bf16.msra.mxu0 %v1615
      %1625 = vmatprep.subr.bf16.mxu0 0
      %1626 = vmatpush1.bf16.msra.mxu0 %v1616
      %1627 = vmatprep.subr.bf16.mxu0 0
      %1628 = vmatpush1.bf16.msra.mxu0 0
      %1629 = vmatprep.subr.bf16.mxu0 0
      %1630 = vmatpush1.bf16.msra.mxu0 0
      %1631 = vmatprep.subr.bf16.mxu0 0
      %1632 = vmatpush1.bf16.msra.mxu0 0
      %1633 = vmatprep.subr.bf16.mxu0 0
      %1634 = vmatpush1.bf16.msra.mxu0 0
      %1635 = vmatprep.subr.bf16.mxu0 0
      %1636 = vmatpush1.bf16.msra.mxu0 0
      %1637 = vmatprep.subr.bf16.mxu0 0
      %1638 = vmatpush1.bf16.msra.mxu0 0
      %1639 = vmatprep.subr.bf16.mxu0 0
      %1640 = vmatpush1.bf16.msra.mxu0 0
      %1641 = vmatprep.subr.bf16.mxu0 0
      %1642 = vmatpush1.bf16.msra.mxu0 0
      %1643 = vmatprep.subr.bf16.mxu0 0
      %1644 = vmatpush1.bf16.msra.mxu0 0
      %1645 = vmatprep.subr.bf16.mxu0 0
      %1646 = vmatpush1.bf16.msra.mxu0 0
      %1647 = vmatprep.subr.bf16.mxu0 0
      %1648 = vmatpush1.bf16.msra.mxu0 0
      %1649 = vmatprep.subr.bf16.mxu0 0
      %1650 = vmatpush1.bf16.msra.mxu0 0
      %1651 = vmatprep.subr.bf16.mxu0 0
      %1652 = vmatpush1.bf16.msra.mxu0 0
      %1653 = vmatprep.subr.bf16.mxu0 0
      %1654 = vmatpush1.bf16.msra.mxu0 0
      %1655 = vmatprep.mubr.bf16.mxu0 0
      %1656 = vmatmul.mubr.bf16.gmra.mrb[0].mxu0 %v1621
      %v1657 = vpop.f32.mrb[0].mxu0
      %v1658 = vadd.f32 %v1600, %v1657
      %v1659 = vpop.f32.mrb[0].mxu0
      %v1660 = vpop.f32.mrb[0].mxu0
      %v1661 = vadd.f32 %v1600, %v1660
      %v1662 = vpop.f32.mrb[0].mxu0
      %1663 = vdwg.mxu0
      %v1664 = vpack.c.bf16 %v1591, %v1590
      %v1669 = vunpack.c.l.b16 %v1571
      %v1670 = vunpack.c.l.b16 %v1572
      %v1671 = vunpack.c.l.b16 %v1573
      %v1672 = vunpack.c.l.b16 %v1574
      %v1673 = vpack.c.b16 %v1670, %v1669
      %v1674 = vpack.c.b16 %v1672, %v1671
      %v1678 = vsel %vm1619, %v1664, 0
      %1680 = vmatprep.subr.bf16.mxu0 0
      %1681 = vmatpush1.bf16.msra.mxu0 %v1673
      %1682 = vmatprep.subr.bf16.mxu0 0
      %1683 = vmatpush1.bf16.msra.mxu0 %v1674
      %1684 = vmatprep.subr.bf16.mxu0 0
      %1685 = vmatpush1.bf16.msra.mxu0 0
      %1686 = vmatprep.subr.bf16.mxu0 0
      %1687 = vmatpush1.bf16.msra.mxu0 0
      %1688 = vmatprep.subr.bf16.mxu0 0
      %1689 = vmatpush1.bf16.msra.mxu0 0
      %1690 = vmatprep.subr.bf16.mxu0 0
      %1691 = vmatpush1.bf16.msra.mxu0 0
      %1692 = vmatprep.subr.bf16.mxu0 0
      %1693 = vmatpush1.bf16.msra.mxu0 0
      %1694 = vmatprep.subr.bf16.mxu0 0
      %1695 = vmatpush1.bf16.msra.mxu0 0
      %1696 = vmatprep.subr.bf16.mxu0 0
      %1697 = vmatpush1.bf16.msra.mxu0 0
      %1698 = vmatprep.subr.bf16.mxu0 0
      %1699 = vmatpush1.bf16.msra.mxu0 0
      %1700 = vmatprep.subr.bf16.mxu0 0
      %1701 = vmatpush1.bf16.msra.mxu0 0
      %1702 = vmatprep.subr.bf16.mxu0 0
      %1703 = vmatpush1.bf16.msra.mxu0 0
      %1704 = vmatprep.subr.bf16.mxu0 0
      %1705 = vmatpush1.bf16.msra.mxu0 0
      %1706 = vmatprep.subr.bf16.mxu0 0
      %1707 = vmatpush1.bf16.msra.mxu0 0
      %1708 = vmatprep.subr.bf16.mxu0 0
      %1709 = vmatpush1.bf16.msra.mxu0 0
      %1710 = vmatprep.subr.bf16.mxu0 0
      %1711 = vmatpush1.bf16.msra.mxu0 0
      %1712 = vmatprep.mubr.bf16.mxu0 0
      %1713 = vmatmul.mubr.bf16.gmra.mrb[0].mxu0 %v1678
      %v1714 = vpop.f32.mrb[0].mxu0
      %v1715 = vadd.f32 0.0, %v1714
      %v1716 = vpop.f32.mrb[0].mxu0
      %v1717 = vpop.f32.mrb[0].mxu0
      %v1718 = vadd.f32 0.0, %v1717
      %v1719 = vpop.f32.mrb[0].mxu0
      %1720 = vdwg.mxu0
      %v1721 = vadd.f32 %v1658, %v1715
      %v1722 = vadd.f32 %v1661, %v1718
      %v1723 = vxor.u32 %v1721, 2147483648
      %v1724 = vxor.u32 %v1722, 2147483648
      %v1725 = vmul.f32 %v1723, 1.442695
      %v1726 = vpow.pop %v1725
      %v1727 = vmul.f32 %v1724, 1.442695
      %v1728 = vpow.pop %v1727
      %v1729 = vadd.f32 %v1726, 1.0
      %v1730 = vadd.f32 %v1728, 1.0
      %v1731 = vrcp.pop %v1729
      %v1732 = vmul.f32 1.0, %v1731
      %v1733 = vrcp.pop %v1730
      %v1734 = vmul.f32 1.0, %v1733
      %v1735 = vtanh.pop %v1721
      %v1736 = vtanh.pop %v1722
      %1739 = vrot.lane.b32.xlu0 %v1592, 32
      %v1740 = vpop.permute.xlu0 %1739
      %1741 = vrot.lane.b32.xlu0 %v1593, 32
      %v1742 = vpop.permute.xlu0 %1741
      %v1745 = vmul.f32 %v1732, %v1740
      %v1746 = vmul.f32 %v1734, %v1742
      %1749 = vrot.lane.b32.xlu0 %v1735, 32
      %v1750 = vpop.permute.xlu0 %1749
      %1751 = vrot.lane.b32.xlu0 %v1736, 32
      %v1752 = vpop.permute.xlu0 %1751
      %v1755 = vmul.f32 %v1732, %v1750
      %v1756 = vmul.f32 %v1734, %v1752
      %1759 = vrot.lane.b32.xlu0 %v1755, 32
      %v1760 = vpop.permute.xlu0 %1759
      %1761 = vrot.lane.b32.xlu0 %v1756, 32
      %v1762 = vpop.permute.xlu0 %1761
      %v1765 = vadd.f32 %v1745, %v1760
      %v1766 = vadd.f32 %v1746, %v1762
      %v1767 = vtanh.pop %v1765
      %v1768 = vtanh.pop %v1766
      %1771 = vrot.lane.b32.xlu0 %v1767, 32
      %v1772 = vpop.permute.xlu0 %1771
      %1773 = vrot.lane.b32.xlu0 %v1768, 32
      %v1774 = vpop.permute.xlu0 %1773
      %v1777 = vmul.f32 %v1732, %v1772
      %v1778 = vmul.f32 %v1734, %v1774
      %1781 = vrot.lane.b32.xlu0 %v1777, 64
      %v1782 = vpop.permute.xlu0 %1781
      %1783 = vrot.lane.b32.xlu0 %v1778, 64
      %v1784 = vpop.permute.xlu0 %1783
      %1787 = vst.msk [vmem:[#allocation2] sm:$0xff] %vm1619, %v1782
      %1788 = vst.msk [vmem:[#allocation2 + $0x8] sm:$0xff] %vm1619, %v1784
      %1791 = vrot.lane.b32.xlu0 %v1765, 96
      %v1792 = vpop.permute.xlu0 %1791
      %1793 = vrot.lane.b32.xlu0 %v1766, 96
      %v1794 = vpop.permute.xlu0 %1793
      %1797 = vst.msk [vmem:[#allocation3] sm:$0xff] %vm1619, %v1792
      %1798 = vst.msk [vmem:[#allocation3 + $0x8] sm:$0xff] %vm1619, %v1794
      %v1799 = vpack.c.bf16 %v1778, %v1777
      %v1801 = vlaneseq
      %v1802 = vshrl.u32 %v1801, 7
      %v1803 = vsub.s32 0, %v1802
      %v1804 = vrot.slane %v1580, %v1803
      %v1805 = vlaneseq
      %v1806 = vshrl.u32 %v1805, 7
      %v1807 = vsub.s32 1, %v1806
      %v1808 = vrot.slane %v1580, %v1807
      %1812 = vrot.lane.b32.xlu0 %v1799, 64
      %v1813 = vpop.permute.xlu0 %1812
      %v1818 = vunpack.c.l.b16 %v1576
      %v1819 = vunpack.c.h.b16 %v1576
      %v1820 = vunpack.c.l.b16 %v1577
      %v1821 = vunpack.c.h.b16 %v1577
      %v1822 = vunpack.c.l.b16 %v1578
      %v1823 = vunpack.c.h.b16 %v1578
      %v1824 = vunpack.c.l.b16 %v1579
      %v1825 = vunpack.c.h.b16 %v1579
      %v1826 = vpack.c.b16 %v1820, %v1818
      %v1827 = vpack.c.b16 %v1821, %v1819
      %v1828 = vpack.c.b16 %v1824, %v1822
      %v1829 = vpack.c.b16 %v1825, %v1823
      %v1835 = vsel %vm1619, %v1813, 0
      %1837 = vmatprep.subr.bf16.mxu0 %v1827
      %1838 = vmatpush1.bf16.msra.mxu0 %v1826
      %1839 = vmatprep.subr.bf16.mxu0 %v1829
      %1840 = vmatpush1.bf16.msra.mxu0 %v1828
      %1841 = vmatprep.subr.bf16.mxu0 0
      %1842 = vmatpush1.bf16.msra.mxu0 0
      %1843 = vmatprep.subr.bf16.mxu0 0
      %1844 = vmatpush1.bf16.msra.mxu0 0
      %1845 = vmatprep.subr.bf16.mxu0 0
      %1846 = vmatpush1.bf16.msra.mxu0 0
      %1847 = vmatprep.subr.bf16.mxu0 0
      %1848 = vmatpush1.bf16.msra.mxu0 0
      %1849 = vmatprep.subr.bf16.mxu0 0
      %1850 = vmatpush1.bf16.msra.mxu0 0
      %1851 = vmatprep.subr.bf16.mxu0 0
      %1852 = vmatpush1.bf16.msra.mxu0 0
      %1853 = vmatprep.subr.bf16.mxu0 0
      %1854 = vmatpush1.bf16.msra.mxu0 0
      %1855 = vmatprep.subr.bf16.mxu0 0
      %1856 = vmatpush1.bf16.msra.mxu0 0
      %1857 = vmatprep.subr.bf16.mxu0 0
      %1858 = vmatpush1.bf16.msra.mxu0 0
      %1859 = vmatprep.subr.bf16.mxu0 0
      %1860 = vmatpush1.bf16.msra.mxu0 0
      %1861 = vmatprep.subr.bf16.mxu0 0
      %1862 = vmatpush1.bf16.msra.mxu0 0
      %1863 = vmatprep.subr.bf16.mxu0 0
      %1864 = vmatpush1.bf16.msra.mxu0 0
      %1865 = vmatprep.subr.bf16.mxu0 0
      %1866 = vmatpush1.bf16.msra.mxu0 0
      %1867 = vmatprep.subr.bf16.mxu0 0
      %1868 = vmatpush1.bf16.msra.mxu0 0
      %1869 = vmatprep.mubr.bf16.mxu0 0
      %1870 = vmatmul.mubr.bf16.gmra.mrb[0].mxu0 %v1835
      %v1871 = vpop.f32.mrb[0].mxu0
      %v1872 = vadd.f32 %v1804, %v1871
      %v1873 = vpop.f32.mrb[0].mxu0
      %v1874 = vadd.f32 %v1808, %v1873
      %v1875 = vpop.f32.mrb[0].mxu0
      %v1876 = vadd.f32 %v1804, %v1875
      %v1877 = vpop.f32.mrb[0].mxu0
      %v1878 = vadd.f32 %v1808, %v1877
      %1879 = vdwg.mxu0
      %1880 = vmax.xlane.f32.xlu0 %v1872
      %v1881 = vpop.xlane.xlu0 %1880
      %1882 = vmax.xlane.f32.xlu0 %v1876
      %v1883 = vpop.xlane.xlu0 %1882
      %v1884 = vsub.f32 %v1872, %v1881
      %v1885 = vsub.f32 %v1876, %v1883
      %v1886 = vmul.f32 %v1884, 1.442695
      %v1887 = vpow.pop %v1886
      %v1888 = vmul.f32 %v1885, 1.442695
      %v1889 = vpow.pop %v1888
      %1890 = vadd.xlane.f32.xlu0 %v1887
      %v1891 = vpop.xlane.xlu0 %1890
      %1892 = vadd.xlane.f32.xlu0 %v1889
      %v1893 = vpop.xlane.xlu0 %1892
      %v1894 = vlog2.pop %v1891
      %v1895 = vmul.f32 %v1894, 0.6931472
      %v1896 = vlog2.pop %v1893
      %v1897 = vmul.f32 %v1896, 0.6931472
      %v1898 = vadd.f32 %v1881, %v1895
      %v1899 = vadd.f32 %v1883, %v1897
      %v1900 = vsub.f32 %v1872, %v1898
      %v1901 = vsub.f32 %v1876, %v1899
      %1902 = vst [vmem:[%s596] sm:$0xff] %v1900
      %1903 = vst [vmem:[%s596 + $0x8] sm:$0xff] %v1901
      %v1904 = vld [vmem:[#allocation4] sm:$0xff]
      %v1905 = vld [vmem:[#allocation4 + $0x8] sm:$0xff]
      %v1906 = vld [vmem:[#allocation5] sm:$0xff]
      %v1907 = vld [vmem:[#allocation5 + $0x8] sm:$0xff]
      %v1908 = vpack.c.bf16 %v1905, %v1904
      %v1913 = vunpack.c.l.b16 %v1581
      %v1914 = vunpack.c.l.b16 %v1582
      %v1915 = vunpack.c.l.b16 %v1583
      %v1916 = vunpack.c.l.b16 %v1584
      %v1917 = vpack.c.b16 %v1914, %v1913
      %v1918 = vpack.c.b16 %v1916, %v1915
      %v1922 = vsel %vm1619, %v1908, 0
      %1924 = vmatprep.subr.bf16.mxu0 0
      %1925 = vmatpush1.bf16.msra.mxu0 %v1917
      %1926 = vmatprep.subr.bf16.mxu0 0
      %1927 = vmatpush1.bf16.msra.mxu0 %v1918
      %1928 = vmatprep.subr.bf16.mxu0 0
      %1929 = vmatpush1.bf16.msra.mxu0 0
      %1930 = vmatprep.subr.bf16.mxu0 0
      %1931 = vmatpush1.bf16.msra.mxu0 0
      %1932 = vmatprep.subr.bf16.mxu0 0
      %1933 = vmatpush1.bf16.msra.mxu0 0
      %1934 = vmatprep.subr.bf16.mxu0 0
      %1935 = vmatpush1.bf16.msra.mxu0 0
      %1936 = vmatprep.subr.bf16.mxu0 0
      %1937 = vmatpush1.bf16.msra.mxu0 0
      %1938 = vmatprep.subr.bf16.mxu0 0
      %1939 = vmatpush1.bf16.msra.mxu0 0
      %1940 = vmatprep.subr.bf16.mxu0 0
      %1941 = vmatpush1.bf16.msra.mxu0 0
      %1942 = vmatprep.subr.bf16.mxu0 0
      %1943 = vmatpush1.bf16.msra.mxu0 0
      %1944 = vmatprep.subr.bf16.mxu0 0
      %1945 = vmatpush1.bf16.msra.mxu0 0
      %1946 = vmatprep.subr.bf16.mxu0 0
      %1947 = vmatpush1.bf16.msra.mxu0 0
      %1948 = vmatprep.subr.bf16.mxu0 0
      %1949 = vmatpush1.bf16.msra.mxu0 0
      %1950 = vmatprep.subr.bf16.mxu0 0
      %1951 = vmatpush1.bf16.msra.mxu0 0
      %1952 = vmatprep.subr.bf16.mxu0 0
      %1953 = vmatpush1.bf16.msra.mxu0 0
      %1954 = vmatprep.subr.bf16.mxu0 0
      %1955 = vmatpush1.bf16.msra.mxu0 0
      %1956 = vmatprep.mubr.bf16.mxu0 0
      %1957 = vmatmul.mubr.bf16.gmra.mrb[0].mxu0 %v1922
      %v1958 = vpop.f32.mrb[0].mxu0
      %v1959 = vadd.f32 0.0, %v1958
      %v1960 = vpop.f32.mrb[0].mxu0
      %v1961 = vpop.f32.mrb[0].mxu0
      %v1962 = vadd.f32 0.0, %v1961
      %v1963 = vpop.f32.mrb[0].mxu0
      %1964 = vdwg.mxu0
      %v1965 = vadd.f32 %v1874, %v1959
      %v1966 = vadd.f32 %v1878, %v1962
      %v1967 = vxor.u32 %v1965, 2147483648
      %v1968 = vxor.u32 %v1966, 2147483648
      %v1969 = vmul.f32 %v1967, 1.442695
      %v1970 = vpow.pop %v1969
      %v1971 = vmul.f32 %v1968, 1.442695
      %v1972 = vpow.pop %v1971
      %v1973 = vadd.f32 %v1970, 1.0
      %v1974 = vadd.f32 %v1972, 1.0
      %v1975 = vrcp.pop %v1973
      %v1976 = vmul.f32 1.0, %v1975
      %v1977 = vrcp.pop %v1974
      %v1978 = vmul.f32 1.0, %v1977
      %v1979 = vtanh.pop %v1965
      %v1980 = vtanh.pop %v1966
      %1983 = vrot.lane.b32.xlu0 %v1906, 32
      %v1984 = vpop.permute.xlu0 %1983
      %1985 = vrot.lane.b32.xlu0 %v1907, 32
      %v1986 = vpop.permute.xlu0 %1985
      %v1989 = vmul.f32 %v1976, %v1984
      %v1990 = vmul.f32 %v1978, %v1986
      %1993 = vrot.lane.b32.xlu0 %v1979, 32
      %v1994 = vpop.permute.xlu0 %1993
      %1995 = vrot.lane.b32.xlu0 %v1980, 32
      %v1996 = vpop.permute.xlu0 %1995
      %v1999 = vmul.f32 %v1976, %v1994
      %v2000 = vmul.f32 %v1978, %v1996
      %2003 = vrot.lane.b32.xlu0 %v1999, 32
      %v2004 = vpop.permute.xlu0 %2003
      %2005 = vrot.lane.b32.xlu0 %v2000, 32
      %v2006 = vpop.permute.xlu0 %2005
      %v2009 = vadd.f32 %v1989, %v2004
      %v2010 = vadd.f32 %v1990, %v2006
      %v2011 = vtanh.pop %v2009
      %v2012 = vtanh.pop %v2010
      %2015 = vrot.lane.b32.xlu0 %v2011, 32
      %v2016 = vpop.permute.xlu0 %2015
      %2017 = vrot.lane.b32.xlu0 %v2012, 32
      %v2018 = vpop.permute.xlu0 %2017
      %v2021 = vmul.f32 %v1976, %v2016
      %v2022 = vmul.f32 %v1978, %v2018
      %2025 = vrot.lane.b32.xlu0 %v2021, 64
      %v2026 = vpop.permute.xlu0 %2025
      %2027 = vrot.lane.b32.xlu0 %v2022, 64
      %v2028 = vpop.permute.xlu0 %2027
      %2031 = vst.msk [vmem:[#allocation4] sm:$0xff] %vm1619, %v2026
      %2032 = vst.msk [vmem:[#allocation4 + $0x8] sm:$0xff] %vm1619, %v2028
      %2035 = vrot.lane.b32.xlu0 %v2009, 96
      %v2036 = vpop.permute.xlu0 %2035
      %2037 = vrot.lane.b32.xlu0 %v2010, 96
      %v2038 = vpop.permute.xlu0 %2037
      %2041 = vst.msk [vmem:[#allocation5] sm:$0xff] %vm1619, %v2036
      %2042 = vst.msk [vmem:[#allocation5 + $0x8] sm:$0xff] %vm1619, %v2038
      %v2043 = vpack.c.bf16 %v2022, %v2021
      %v2045 = vlaneseq
      %v2046 = vshrl.u32 %v2045, 7
      %v2047 = vsub.s32 0, %v2046
      %v2048 = vrot.slane %v1589, %v2047
      %2051 = vrot.lane.b32.xlu0 %v2043, 64
      %v2052 = vpop.permute.xlu0 %2051
      %v2057 = vunpack.c.l.b16 %v1585
      %v2058 = vunpack.c.l.b16 %v1586
      %v2059 = vunpack.c.l.b16 %v1587
      %v2060 = vunpack.c.l.b16 %v1588
      %v2061 = vpack.c.b16 %v2058, %v2057
      %v2062 = vpack.c.b16 %v2060, %v2059
      %v2066 = vsel %vm1619, %v2052, 0
      %2068 = vmatprep.subr.bf16.mxu0 0
      %2069 = vmatpush1.bf16.msra.mxu0 %v2061
      %2070 = vmatprep.subr.bf16.mxu0 0
      %2071 = vmatpush1.bf16.msra.mxu0 %v2062
      %2072 = vmatprep.subr.bf16.mxu0 0
      %2073 = vmatpush1.bf16.msra.mxu0 0
      %2074 = vmatprep.subr.bf16.mxu0 0
      %2075 = vmatpush1.bf16.msra.mxu0 0
      %2076 = vmatprep.subr.bf16.mxu0 0
      %2077 = vmatpush1.bf16.msra.mxu0 0
      %2078 = vmatprep.subr.bf16.mxu0 0
      %2079 = vmatpush1.bf16.msra.mxu0 0
      %2080 = vmatprep.subr.bf16.mxu0 0
      %2081 = vmatpush1.bf16.msra.mxu0 0
      %2082 = vmatprep.subr.bf16.mxu0 0
      %2083 = vmatpush1.bf16.msra.mxu0 0
      %2084 = vmatprep.subr.bf16.mxu0 0
      %2085 = vmatpush1.bf16.msra.mxu0 0
      %2086 = vmatprep.subr.bf16.mxu0 0
      %2087 = vmatpush1.bf16.msra.mxu0 0
      %2088 = vmatprep.subr.bf16.mxu0 0
      %2089 = vmatpush1.bf16.msra.mxu0 0
      %2090 = vmatprep.subr.bf16.mxu0 0
      %2091 = vmatpush1.bf16.msra.mxu0 0
      %2092 = vmatprep.subr.bf16.mxu0 0
      %2093 = vmatpush1.bf16.msra.mxu0 0
      %2094 = vmatprep.subr.bf16.mxu0 0
      %2095 = vmatpush1.bf16.msra.mxu0 0
      %2096 = vmatprep.subr.bf16.mxu0 0
      %2097 = vmatpush1.bf16.msra.mxu0 0
      %2098 = vmatprep.subr.bf16.mxu0 0
      %2099 = vmatpush1.bf16.msra.mxu0 0
      %2100 = vmatprep.mubr.bf16.mxu0 0
      %2101 = vmatmul.mubr.bf16.gmra.mrb[0].mxu0 %v2066
      %v2102 = vpop.f32.mrb[0].mxu0
      %v2103 = vadd.f32 %v2048, %v2102
      %v2104 = vpop.f32.mrb[0].mxu0
      %v2105 = vpop.f32.mrb[0].mxu0
      %v2106 = vadd.f32 %v2048, %v2105
      %v2107 = vpop.f32.mrb[0].mxu0
      %2108 = vdwg.mxu0
      %v2109 = vsub.f32 %v2103, %v1590
      %v2110 = vsub.f32 %v2106, %v1591
      %v2111 = vld [vmem:[#allocation6] sm:$0xff]
      %v2112 = vld [vmem:[#allocation6 + $0x8] sm:$0xff]
      %v2113 = vmul.f32 %v2109, %v2109
      %v2114 = vmul.f32 %v2110, %v2110
      %v2115 = vld [vmem:[%s586] sm:$0xff]
      %v2116 = vld [vmem:[%s586 + $0x8] sm:$0xff]
      %2118 = vset.pattern.permute.xlu0 0
      %2119 = vperm.xlu0 %2118, %v2115
      %v2120 = vpop.permute.xlu0 %2119
      %2123 = vset.pattern.permute.xlu0 0
      %2124 = vperm.xlu0 %2123, %v2116
      %v2125 = vpop.permute.xlu0 %2124
      %v2127 = vmul.f32 %v2113, %v2120
      %v2128 = vmul.f32 %v2114, %v2125
      %v2129 = vadd.f32 %v2111, %v2127
      %v2130 = vadd.f32 %v2112, %v2128
      %2131 = vst.msk [vmem:[#allocation6] sm:$0xff] %vm1619, %v2129
      %2132 = vst.msk [vmem:[#allocation6 + $0x8] sm:$0xff] %vm1619, %v2130
      %p2133 = scmp.eq.s32.totalorder %s32, 4
      // Predicated region
      $region81: #{encode_decode_arnet_forward.1} parent=75 // pred_check
        %p2134 = pneg %p2133
      $region82: #{encode_decode_arnet_forward.1} parent=75 // pred_check_branch
        %2136 = sbr.rel (%p2134) target = $region84
      $region83: #{encode_decode_arnet_forward.1} parent=75 // pred_region
        %v2137 = vld [vmem:[#allocation6] sm:$0xff]
        %v2138 = vld [vmem:[#allocation6 + $0x8] sm:$0xff]
        %v2139 = vsel %vm1619, %v2137, 0.0
        %v2140 = vsel %vm1619, %v2138, 0.0
        %v2141 = vadd.f32 %v2139, %v2140
        %v2142 = vrot.slane %v2141, 4
        %v2143 = vadd.f32 %v2141, %v2142
        %v2144 = vrot.slane %v2143, 2
        %v2145 = vadd.f32 %v2143, %v2144
        %v2146 = vrot.slane %v2145, 1
        %v2147 = vadd.f32 %v2145, %v2146
        %vm2148 = vcmask 253952
        %2149 = vst.msk [vmem:[%s600] sm:$0x1] %vm2148, %v2147
      $region84: #{encode_decode_arnet_forward.1} parent=75 // pred_fallthru
        _
      %s2150 = smul.u32 2, %s31
      %p2151 = scmp.lt.s32.totalorder %s32, 4
      %s2152 = scalar_select %p2151, %s32, 4
      %p2153 = scmp.lt.s32.totalorder %s2150, 1
      %s2154 = scalar_select %p2153, %s2150, 1
      %s2155 = smul.addr %s2152, 2
      %s2156 = sadd.s32 %s2154, %s2155
      %s2157 = smul.addr %s2156, 8
      %s2158 = scalar_lea.vmem %s14, %s2157
      %p2159 = scmp.lt.s32.totalorder %s31, 0
      %s2160 = scalar_select %p2159, %s31, 0
      %s2161 = scalar_lea.vmem %s15, %s2160
      // Predicated region
      $region85: #{encode_decode_arnet_forward.1} parent=75 // pred_check
        %p2162 = pneg %p372
      $region86: #{encode_decode_arnet_forward.1} parent=75 // pred_check_branch
        %2164 = sbr.rel (%p2162) target = $region88
      $region87: #{encode_decode_arnet_forward.1} parent=75 // pred_region
        %s2165 = smul.u32 2, %s31
      $region88: #{encode_decode_arnet_forward.1} parent=75 // pred_fallthru
        _
      // Predicated region
      $region89: #{encode_decode_arnet_forward.1} parent=75 // pred_check
        %p2166 = pneg %p398
      $region90: #{encode_decode_arnet_forward.1} parent=75 // pred_check_branch
        %2168 = sbr.rel (%p2166) target = $region92
      $region91: #{encode_decode_arnet_forward.1} parent=75 // pred_region
        _
      $region92: #{encode_decode_arnet_forward.1} parent=75 // pred_fallthru
        _
      // Predicated region
      $region93: #{encode_decode_arnet_forward.1} parent=75 // pred_check
        %p2169 = pneg %p398
      $region94: #{encode_decode_arnet_forward.1} parent=75 // pred_check_branch
        %2171 = sbr.rel (%p2169) target = $region96
      $region95: #{encode_decode_arnet_forward.1} parent=75 // pred_region
        %p2172 = scmp.lt.s32.totalorder %s31, 0
        %s2173 = scalar_select %p2172, %s31, 0
        %s2174 = scalar_lea.vmem %s15, %s2173
      $region96: #{encode_decode_arnet_forward.1} parent=75 // pred_fallthru
        _
    $region76: #{encode_decode_arnet_forward.1} parent=5 // pred_fallthru
      _
    %p2175 = scmp.le.s32.totalorder 2, %s22
    // Predicated region
    $region97: #{encode_decode_arnet_forward.1} parent=5 // pred_check
      %p2176 = pneg %p2175
    $region98: #{encode_decode_arnet_forward.1} parent=5 // pred_check_branch
      %2178 = sbr.rel (%p2176) target = $region100
    $region99: #{encode_decode_arnet_forward.1} parent=5 // pred_region
      %s2179 = ssub.s32 %s22, 2
      // Predicated region
      $region101: #{encode_decode_arnet_forward.1} parent=99 // pred_check
        %p2180 = pneg %p378
      $region102: #{encode_decode_arnet_forward.1} parent=99 // pred_check_branch
        %2182 = sbr.rel (%p2180) target = $region104
      $region103: #{encode_decode_arnet_forward.1} parent=99 // pred_region
        %s2183 = smul.u32 2, %s33
        %p2184 = scmp.lt.s32.totalorder %s34, 4
        %s2185 = scalar_select %p2184, %s34, 4
        %p2186 = scmp.lt.s32.totalorder %s2183, 1
        %s2187 = scalar_select %p2186, %s2183, 1
        %s2188 = smul.addr %s2185, 2
        %s2189 = sadd.s32 %s2187, %s2188
        %s2190 = smul.addr %s2189, 8
        %s2191 = scalar_lea.vmem %s14, %s2190
      $region104: #{encode_decode_arnet_forward.1} parent=99 // pred_fallthru
        _
    $region100: #{encode_decode_arnet_forward.1} parent=5 // pred_fallthru
      _
  $region6: #{encode_decode_arnet_forward.1} parent=0 // loop_footer
    %s26 = sadd.s32 1, %s22
  $region7: #{encode_decode_arnet_forward.1} parent=0 // loop_footer_branch
    %21 = sbr.rel target = $region3
  $region8: #{encode_decode_arnet_forward.1} parent=0 // loop_exit
    _

</llo_original>
